<compile_context>
chip_gen: v7x
topology: tpu7x:2x2x1
jax: 0.10.0
libtpu: 0.0.40
codegen_flags: <defaults>
</compile_context>

<pallas_src>
import functools

import jax
import jax.numpy as jnp
import numpy as np
from jax.experimental import pallas as pl
from jax.experimental.pallas import tpu as pltpu


# ---------------------------------------------------------------------------
# Pallas kernel: one (batch, head) pair per grid step
# ---------------------------------------------------------------------------
def attention_kernel(x_ref, xT_ref, wq_ref, wkT_ref, wv_ref, wo_ref, bo_ref,
                     o_ref, *, n_valid=None):
    h = pl.program_id(1)

    x = x_ref[0]            # (C, Np)  f32, lane-dense
    xT = xT_ref[0]          # (Np, C)  f32 (tiny: C channels)

    # -- per-head 1x1-conv projections (K = C, negligible FLOPs; keep f32) --
    q = jnp.dot(wq_ref[0], x, preferred_element_type=jnp.float32)     # (dh, Np), scale folded
    v = jnp.dot(wv_ref[0], x, preferred_element_type=jnp.float32)     # (dh, Np)
    kT = jnp.dot(xT, wkT_ref[0], preferred_element_type=jnp.float32)  # (Np, dh)

    # -- sim^T[j, i] = sum_d k[d, j] * q[d, i] : bf16 MXU, f32 accumulate ----
    sT = jnp.dot(kT.astype(jnp.bfloat16), q.astype(jnp.bfloat16),
                 preferred_element_type=jnp.float32)                   # (Np_j, Np_i)

    if n_valid is not None:  # static: only traced when N was padded
        j_idx = jax.lax.broadcasted_iota(jnp.int32, sT.shape, 0)
        sT = jnp.where(j_idx < n_valid, sT, -1e30)

    # -- numerically-stable softmax over j (axis 0), normalization deferred --
    m = jnp.max(sT, axis=0, keepdims=True)          # (1, Np_i)
    p = jnp.exp(sT - m)                             # (Np_j, Np_i) f32
    denom = jnp.sum(p, axis=0, keepdims=True)       # (1, Np_i)

    # -- o_un[d, i] = sum_j v[d, j] * p[j, i] : bf16 MXU, f32 accumulate -----
    o_un = jnp.dot(v.astype(jnp.bfloat16), p.astype(jnp.bfloat16),
                   preferred_element_type=jnp.float32)                 # (dh, Np)
    # deferred normalization: dh*N multiplies instead of an N^2 divide
    o_head = o_un * pl.reciprocal(denom, approx=True)                  # (dh, Np)

    # -- fold this head's to_out contribution: (C, dh) @ (dh, Np) ------------
    contrib = jnp.dot(wo_ref[0], o_head, preferred_element_type=jnp.float32)

    @pl.when(h == 0)
    def _():
        # initialize the resident output block with the to_out bias
        o_ref[0] = jnp.broadcast_to(bo_ref[...], contrib.shape).astype(o_ref.dtype)

    o_ref[0] = o_ref[0] + contrib.astype(o_ref.dtype)


# ---------------------------------------------------------------------------
# Wrapper (layout / parameter packing / pallas_call)
# ---------------------------------------------------------------------------
def attention(x_nchw, params, *, heads=4, dim_head=32):
    wqkv, wo, bo = params   # torch shapes: (3*hid, C, 1, 1), (C, hid, 1, 1), (C,)
    B, C, H, W = x_nchw.shape
    N = H * W
    hidden = heads * dim_head
    scale = dim_head ** (-0.5)

    # lane-dense layout: channels in sublanes, spatial in lanes; pad N to 128
    n_pad = (-N) % 128
    Np = N + n_pad
    x = x_nchw.reshape(B, C, N)
    if n_pad:
        x = jnp.pad(x, ((0, 0), (0, 0), (0, n_pad)))
    xT = jnp.transpose(x, (0, 2, 1))                               # (B, Np, C)

    # weight packing: head-major; q scale folded (exact algebra, no bias/nl)
    w = wqkv.reshape(3 * hidden, C)
    wq = (w[:hidden] * scale).reshape(heads, dim_head, C)          # (h, dh, C)
    wkT = jnp.transpose(w[hidden:2 * hidden].reshape(heads, dim_head, C),
                        (0, 2, 1))                                 # (h, C, dh)
    wv = w[2 * hidden:].reshape(heads, dim_head, C)                # (h, dh, C)
    woh = jnp.transpose(wo.reshape(C, heads, dim_head), (1, 0, 2)) # (h, C, dh)
    bo2 = bo.reshape(C, 1)

    kernel = functools.partial(attention_kernel,
                               n_valid=(N if n_pad else None))

    out = pl.pallas_call(
        kernel,
        out_shape=jax.ShapeDtypeStruct((B, C, Np), x.dtype),
        grid=(B, heads),
        in_specs=[
            pl.BlockSpec((1, C, Np), lambda b, h: (b, 0, 0)),          # x
            pl.BlockSpec((1, Np, C), lambda b, h: (b, 0, 0)),          # x^T
            pl.BlockSpec((1, dim_head, C), lambda b, h: (h, 0, 0)),    # wq (scaled)
            pl.BlockSpec((1, C, dim_head), lambda b, h: (h, 0, 0)),    # wk^T
            pl.BlockSpec((1, dim_head, C), lambda b, h: (h, 0, 0)),    # wv
            pl.BlockSpec((1, C, dim_head), lambda b, h: (h, 0, 0)),    # wo (per head)
            pl.BlockSpec((C, 1), lambda b, h: (0, 0)),                 # bias
        ],
        out_specs=pl.BlockSpec((1, C, Np), lambda b, h: (b, 0, 0)),
        compiler_params=pltpu.CompilerParams(
            # batch axis sharded across TensorCores; heads axis accumulates
            dimension_semantics=("parallel", "arbitrary"),
            # explicit scoped-VMEM headroom (safe on v5e/v6e/v7x); per-step
            # working set here is only a couple of MiB.
            vmem_limit_bytes=48 * 1024 * 1024),
    )(x, xT, wq, wkT, wv, woh, bo2)

    if n_pad:
        out = out[:, :, :N]
    return out.reshape(B, C, H, W)


# ---------------------------------------------------------------------------
# Pure-JAX reference (mirrors the PyTorch module op-by-op) for validation
# ---------------------------------------------------------------------------
def attention_reference(x_nchw, params, *, heads=4, dim_head=32):
    wqkv, wo, bo = params
    B, C, H, W = x_nchw.shape
    N = H * W
    hidden = heads * dim_head
    scale = dim_head ** (-0.5)

    x = x_nchw.reshape(B, C, N)
    qkv = jnp.einsum('oc,bcn->bon', wqkv.reshape(3 * hidden, C), x)
    q, k, v = jnp.split(qkv, 3, axis=1)                      # each (B, hidden, N)

    def split_heads(t):                                      # b (h d) n -> b h d n
        return t.reshape(B, heads, dim_head, N)

    q, k, v = map(split_heads, (q, k, v))
    q = q * scale
    sim = jnp.einsum('bhdi,bhdj->bhij', q, k)
    attn = jax.nn.softmax(sim, axis=-1)
    o = jnp.einsum('bhij,bhdj->bhid', attn, v)               # (B, h, N, d)
    o = jnp.transpose(o, (0, 1, 3, 2)).reshape(B, hidden, N)  # b (h d) n
    out = jnp.einsum('oc,bcn->bon', wo.reshape(C, hidden), o) + bo.reshape(1, C, 1)
    return out.reshape(B, C, H, W)


if __name__ == "__main__":
    B, dim, H, W = 2, 4, 16, 16          # Attention(dim=4, heads=4, dim_head=32)
    heads, dim_head = 4, 32
    hidden = heads * dim_head

    key = jax.random.PRNGKey(0)
    k0, k1, k2, k3 = jax.random.split(key, 4)
    x = jax.random.normal(k0, (B, dim, H, W), jnp.float32)
    wqkv = jax.random.normal(k1, (3 * hidden, dim, 1, 1), jnp.float32) * 0.1
    wo = jax.random.normal(k2, (dim, hidden, 1, 1), jnp.float32) * 0.1
    bo = jax.random.normal(k3, (dim,), jnp.float32) * 0.1
    params = (wqkv, wo, bo)

    out = jax.block_until_ready(attention(x, params, heads=heads, dim_head=dim_head))
    ref = jax.block_until_ready(attention_reference(x, params, heads=heads,
                                                    dim_head=dim_head))

    assert out.shape == (B, dim, H, W), out.shape
    # bf16 MXU operands + approx reciprocal vs f32 reference -> loose-ish tol
    np.testing.assert_allclose(np.asarray(out), np.asarray(ref),
                               atol=2e-2, rtol=2e-2)
    print("KERNEL_OK")
</pallas_src>

<mosaic_0001>
module attributes {stable_mosaic.version = 11 : i64} {
  func.func @attention_kernel(%arg0: i32, %arg1: i32, %arg2: memref<1x4x256xf32, #tpu.memory_space<vmem>>, %arg3: memref<1x256x4xf32, #tpu.memory_space<vmem>>, %arg4: memref<1x32x4xf32, #tpu.memory_space<vmem>>, %arg5: memref<1x4x32xf32, #tpu.memory_space<vmem>>, %arg6: memref<1x32x4xf32, #tpu.memory_space<vmem>>, %arg7: memref<1x4x32xf32, #tpu.memory_space<vmem>>, %arg8: memref<4x1xf32, #tpu.memory_space<vmem>>, %arg9: memref<1x4x256xf32, #tpu.memory_space<vmem>>) attributes {dimension_semantics = [#tpu.dimension_semantics<parallel>, #tpu.dimension_semantics<arbitrary>], iteration_bounds = array<i64: 2, 4>, scalar_prefetch = 0 : i64, scratch_operands = 0 : i64, tpu.core_type = #tpu.core_type<tc>, window_params = [{transform_indices = @transform_0, window_bounds = array<i64: 1, 4, 256>}, {transform_indices = @transform_1, window_bounds = array<i64: 1, 256, 4>}, {transform_indices = @transform_2, window_bounds = array<i64: 1, 32, 4>}, {transform_indices = @transform_3, window_bounds = array<i64: 1, 4, 32>}, {transform_indices = @transform_4, window_bounds = array<i64: 1, 32, 4>}, {transform_indices = @transform_5, window_bounds = array<i64: 1, 4, 32>}, {pipeline_mode = #tpu.pipeline_mode<synchronous>, transform_indices = @transform_6, window_bounds = array<i64: 4, 1>}, {transform_indices = @transform_7, window_bounds = array<i64: 1, 4, 256>}]} {
    %c0 = arith.constant 0 : index
    %c0_0 = arith.constant 0 : index
    %c0_1 = arith.constant 0 : index
    %0 = vector.load %arg2[%c0, %c0_0, %c0_1] : memref<1x4x256xf32, #tpu.memory_space<vmem>>, vector<1x4x256xf32>
    %1 = vector.shape_cast %0 : vector<1x4x256xf32> to vector<4x256xf32>
    %c0_2 = arith.constant 0 : index
    %c0_3 = arith.constant 0 : index
    %c0_4 = arith.constant 0 : index
    %2 = vector.load %arg3[%c0_2, %c0_3, %c0_4] : memref<1x256x4xf32, #tpu.memory_space<vmem>>, vector<1x256x4xf32>
    %3 = vector.shape_cast %2 : vector<1x256x4xf32> to vector<256x4xf32>
    %c0_5 = arith.constant 0 : index
    %c0_6 = arith.constant 0 : index
    %c0_7 = arith.constant 0 : index
    %4 = vector.load %arg4[%c0_5, %c0_6, %c0_7] : memref<1x32x4xf32, #tpu.memory_space<vmem>>, vector<1x32x4xf32>
    %5 = vector.shape_cast %4 : vector<1x32x4xf32> to vector<32x4xf32>
    %cst = arith.constant dense<0.000000e+00> : vector<32x256xf32>
    %6 = tpu.matmul %5, %1, %cst {dimension_numbers = #tpu.dot_dimension_numbers<[1], [0], [0], [1], [0, 0, 1, 1], [], []>} : vector<32x4xf32>, vector<4x256xf32>, vector<32x256xf32> -> vector<32x256xf32>
    %c0_8 = arith.constant 0 : index
    %c0_9 = arith.constant 0 : index
    %c0_10 = arith.constant 0 : index
    %7 = vector.load %arg6[%c0_8, %c0_9, %c0_10] : memref<1x32x4xf32, #tpu.memory_space<vmem>>, vector<1x32x4xf32>
    %8 = vector.shape_cast %7 : vector<1x32x4xf32> to vector<32x4xf32>
    %cst_11 = arith.constant dense<0.000000e+00> : vector<32x256xf32>
    %9 = tpu.matmul %8, %1, %cst_11 {dimension_numbers = #tpu.dot_dimension_numbers<[1], [0], [0], [1], [0, 0, 1, 1], [], []>} : vector<32x4xf32>, vector<4x256xf32>, vector<32x256xf32> -> vector<32x256xf32>
    %c0_12 = arith.constant 0 : index
    %c0_13 = arith.constant 0 : index
    %c0_14 = arith.constant 0 : index
    %10 = vector.load %arg5[%c0_12, %c0_13, %c0_14] : memref<1x4x32xf32, #tpu.memory_space<vmem>>, vector<1x4x32xf32>
    %11 = vector.shape_cast %10 : vector<1x4x32xf32> to vector<4x32xf32>
    %cst_15 = arith.constant dense<0.000000e+00> : vector<256x32xf32>
    %12 = tpu.matmul %3, %11, %cst_15 {dimension_numbers = #tpu.dot_dimension_numbers<[1], [0], [0], [1], [0, 0, 1, 1], [], []>} : vector<256x4xf32>, vector<4x32xf32>, vector<256x32xf32> -> vector<256x32xf32>
    %13 = arith.truncf %12 : vector<256x32xf32> to vector<256x32xbf16>
    %14 = arith.truncf %6 : vector<32x256xf32> to vector<32x256xbf16>
    %cst_16 = arith.constant dense<0.000000e+00> : vector<256x256xf32>
    %15 = tpu.matmul %13, %14, %cst_16 {dimension_numbers = #tpu.dot_dimension_numbers<[1], [0], [0], [1], [0, 0, 1, 1], [], []>} : vector<256x32xbf16>, vector<32x256xbf16>, vector<256x256xf32> -> vector<256x256xf32>
    %cst_17 = arith.constant dense<0xFF800000> : vector<256xf32>
    %16 = vector.multi_reduction <maximumf>, %15, %cst_17 [0] : vector<256x256xf32> to vector<256xf32>
    %17 = vector.shape_cast %16 : vector<256xf32> to vector<1x256xf32>
    %18 = vector.broadcast %17 : vector<1x256xf32> to vector<256x256xf32>
    %19 = arith.subf %15, %18 : vector<256x256xf32>
    %20 = math.exp %19 : vector<256x256xf32>
    %cst_18 = arith.constant dense<0.000000e+00> : vector<256xf32>
    %21 = vector.multi_reduction <add>, %20, %cst_18 [0] : vector<256x256xf32> to vector<256xf32>
    %22 = vector.shape_cast %21 : vector<256xf32> to vector<1x256xf32>
    %23 = arith.truncf %9 : vector<32x256xf32> to vector<32x256xbf16>
    %24 = arith.truncf %20 : vector<256x256xf32> to vector<256x256xbf16>
    %cst_19 = arith.constant dense<0.000000e+00> : vector<32x256xf32>
    %25 = tpu.matmul %23, %24, %cst_19 {dimension_numbers = #tpu.dot_dimension_numbers<[1], [0], [0], [1], [0, 0, 1, 1], [], []>} : vector<32x256xbf16>, vector<256x256xbf16>, vector<32x256xf32> -> vector<32x256xf32>
    %26 = tpu.reciprocal %22 {approx = true} : vector<1x256xf32> -> vector<1x256xf32>
    %27 = vector.broadcast %26 : vector<1x256xf32> to vector<32x256xf32>
    %28 = arith.mulf %25, %27 : vector<32x256xf32>
    %c0_20 = arith.constant 0 : index
    %c0_21 = arith.constant 0 : index
    %c0_22 = arith.constant 0 : index
    %29 = vector.load %arg7[%c0_20, %c0_21, %c0_22] : memref<1x4x32xf32, #tpu.memory_space<vmem>>, vector<1x4x32xf32>
    %30 = vector.shape_cast %29 : vector<1x4x32xf32> to vector<4x32xf32>
    %cst_23 = arith.constant dense<0.000000e+00> : vector<4x256xf32>
    %31 = tpu.matmul %30, %28, %cst_23 {dimension_numbers = #tpu.dot_dimension_numbers<[1], [0], [0], [1], [0, 0, 1, 1], [], []>} : vector<4x32xf32>, vector<32x256xf32>, vector<4x256xf32> -> vector<4x256xf32>
    %c0_i32 = arith.constant 0 : i32
    %32 = arith.cmpi eq, %arg1, %c0_i32 : i32
    %33 = arith.extui %32 : i1 to i32
    %c0_i32_24 = arith.constant 0 : i32
    %34 = arith.cmpi ne, %33, %c0_i32_24 : i32
    scf.if %34 {
      %c0_31 = arith.constant 0 : index
      %c0_32 = arith.constant 0 : index
      %41 = vector.load %arg8[%c0_31, %c0_32] : memref<4x1xf32, #tpu.memory_space<vmem>>, vector<4x1xf32>
      %42 = vector.shape_cast %41 : vector<4x1xf32> to vector<4x1xf32>
      %43 = vector.broadcast %42 : vector<4x1xf32> to vector<4x256xf32>
      %c0_33 = arith.constant 0 : index
      %c0_34 = arith.constant 0 : index
      %c0_35 = arith.constant 0 : index
      %44 = vector.load %arg9[%c0_33, %c0_34, %c0_35] : memref<1x4x256xf32, #tpu.memory_space<vmem>>, vector<1x4x256xf32>
      %45 = vector.shape_cast %44 : vector<1x4x256xf32> to vector<4x256xf32>
      %46 = vector.shape_cast %43 : vector<4x256xf32> to vector<1x4x256xf32>
      tpu.vector_store %arg9[%c0_33, %c0_34, %c0_35], %46 {strides = array<i32>} : memref<1x4x256xf32, #tpu.memory_space<vmem>>, vector<1x4x256xf32>,
    } else {
    }
    %c0_25 = arith.constant 0 : index
    %c0_26 = arith.constant 0 : index
    %c0_27 = arith.constant 0 : index
    %35 = vector.load %arg9[%c0_25, %c0_26, %c0_27] : memref<1x4x256xf32, #tpu.memory_space<vmem>>, vector<1x4x256xf32>
    %36 = vector.shape_cast %35 : vector<1x4x256xf32> to vector<4x256xf32>
    %37 = arith.addf %36, %31 : vector<4x256xf32>
    %c0_28 = arith.constant 0 : index
    %c0_29 = arith.constant 0 : index
    %c0_30 = arith.constant 0 : index
    %38 = vector.load %arg9[%c0_28, %c0_29, %c0_30] : memref<1x4x256xf32, #tpu.memory_space<vmem>>, vector<1x4x256xf32>
    %39 = vector.shape_cast %38 : vector<1x4x256xf32> to vector<4x256xf32>
    %40 = vector.shape_cast %37 : vector<4x256xf32> to vector<1x4x256xf32>
    tpu.vector_store %arg9[%c0_28, %c0_29, %c0_30], %40 {strides = array<i32>} : memref<1x4x256xf32, #tpu.memory_space<vmem>>, vector<1x4x256xf32>,
    return
  }
  func.func @transform_0(%arg0: i32, %arg1: i32) -> (i32, i32, i32) {
    %c0_i32 = arith.constant 0 : i32
    %c0_i32_0 = arith.constant 0 : i32
    %c0_i32_1 = arith.constant 0 : i32
    return %arg0, %c0_i32, %c0_i32_0 : i32, i32, i32
  }
  func.func @transform_1(%arg0: i32, %arg1: i32) -> (i32, i32, i32) {
    %c0_i32 = arith.constant 0 : i32
    %c0_i32_0 = arith.constant 0 : i32
    %c0_i32_1 = arith.constant 0 : i32
    return %arg0, %c0_i32, %c0_i32_0 : i32, i32, i32
  }
  func.func @transform_2(%arg0: i32, %arg1: i32) -> (i32, i32, i32) {
    %c0_i32 = arith.constant 0 : i32
    %c0_i32_0 = arith.constant 0 : i32
    %c0_i32_1 = arith.constant 0 : i32
    return %arg1, %c0_i32, %c0_i32_0 : i32, i32, i32
  }
  func.func @transform_3(%arg0: i32, %arg1: i32) -> (i32, i32, i32) {
    %c0_i32 = arith.constant 0 : i32
    %c0_i32_0 = arith.constant 0 : i32
    %c0_i32_1 = arith.constant 0 : i32
    return %arg1, %c0_i32, %c0_i32_0 : i32, i32, i32
  }
  func.func @transform_4(%arg0: i32, %arg1: i32) -> (i32, i32, i32) {
    %c0_i32 = arith.constant 0 : i32
    %c0_i32_0 = arith.constant 0 : i32
    %c0_i32_1 = arith.constant 0 : i32
    return %arg1, %c0_i32, %c0_i32_0 : i32, i32, i32
  }
  func.func @transform_5(%arg0: i32, %arg1: i32) -> (i32, i32, i32) {
    %c0_i32 = arith.constant 0 : i32
    %c0_i32_0 = arith.constant 0 : i32
    %c0_i32_1 = arith.constant 0 : i32
    return %arg1, %c0_i32, %c0_i32_0 : i32, i32, i32
  }
  func.func @transform_6(%arg0: i32, %arg1: i32) -> (i32, i32) {
    %c0_i32 = arith.constant 0 : i32
    %c0_i32_0 = arith.constant 0 : i32
    %c0_i32_1 = arith.constant 0 : i32
    return %c0_i32, %c0_i32_0 : i32, i32
  }
  func.func @transform_7(%arg0: i32, %arg1: i32) -> (i32, i32, i32) {
    %c0_i32 = arith.constant 0 : i32
    %c0_i32_0 = arith.constant 0 : i32
    %c0_i32_1 = arith.constant 0 : i32
    return %arg0, %c0_i32, %c0_i32_0 : i32, i32, i32
  }
}

</mosaic_0001>

<llo_original>
// kernel: tpu_custom_call.1
$region0: #{tpu_custom_call.1}
  #allocation0 [shape = 'u32[]', space=smem, size = 0x4, offset = 0x4, fixed_abs, tag = 'smem constant byte address 0x4 - core index']
  #allocation1 [shape = 'u32[144,128]{1,0:T(1,128)}', space=vmem, size = 0x12000, scoped, tag = 'internal scratch']
  %s0 = inlined_call_operand.vmem [shape: f32[2,4,256], index: 0, kind: input, shape index: {}]
  %s1 = inlined_call_operand.vmem [shape: f32[2,256,4], index: 1, kind: input, shape index: {}]
  %s2 = inlined_call_operand.vmem [shape: f32[4,32,4], index: 2, kind: input, shape index: {}]
  %s3 = inlined_call_operand.vmem [shape: f32[4,4,32], index: 3, kind: input, shape index: {}]
  %s4 = inlined_call_operand.vmem [shape: f32[4,32,4], index: 4, kind: input, shape index: {}]
  %s5 = inlined_call_operand.vmem [shape: f32[4,4,32], index: 5, kind: input, shape index: {}]
  %s6 = inlined_call_operand.vmem [shape: f32[4,1], index: 6, kind: input, shape index: {}]
  %s7 = inlined_call_operand.hbm [shape: f32[2,4,256], index: 7, kind: output, shape index: {}]
  %s8 = sld [smem:[#allocation0]]
  $region65: #{tpu_custom_call.1} parent=0
    _
  %s10 = ssub.s32 1, %s8
  %s11 = scalar_select 0, %s10, %s8
  $region1: #{tpu_custom_call.1} parent=0
    #allocation2 [shape = 'u8[8192]{0}', space=vmem, size = 0x2000, scoped, tag = 'output window, operand 0']
    #allocation3 [shape = 's32[2]{0}', space=sflag, size = 0x8, scoped, tag = 'scoped memory for tpu_custom_call.1']
    %12 = vsyncpa [#allocation3], 0
    %s13 = scalar_lea.sflag [#allocation3], 1
    %14 = vsyncpa %s13, 0
    loop: start=0, step=1, limit=10
    $region2: #{tpu_custom_call.1} parent=1 // loop_pre_header
      _
    $region3: #{tpu_custom_call.1} parent=1 // loop_header
      %s16 = sphi 0, %s20
      %p17 = scmp.ge.s32.totalorder %s16, 10
      %s23 = sphi 0, %s35
      %s24 = sphi 0, %s31
      %s25 = sphi 0, %s23
      %s26 = sphi 0, %s24
      %s27 = sphi 0, %s25
      %s28 = sphi 0, %s26
      %s38 = sphi 0, %s40
      %s41 = sphi 0, %s38
      %s42 = sphi 0, %s41
      %s58 = sphi 0, %s42
      %s64 = sphi 0, %s66
      %s67 = sphi 0, %s64
      %s68 = sphi 0, %s67
      %s84 = sphi 0, %s68
      %s90 = sphi 0, %s92
      %s93 = sphi 0, %s90
      %s94 = sphi 0, %s93
      %s110 = sphi 0, %s94
      %s116 = sphi 0, %s118
      %s119 = sphi 0, %s116
      %s120 = sphi 0, %s119
      %s136 = sphi 0, %s120
      %s142 = sphi 0, %s144
      %s145 = sphi 0, %s142
      %s146 = sphi 0, %s145
      %s162 = sphi 0, %s146
      %s168 = sphi 0, %s170
      %s171 = sphi 0, %s168
      %s172 = sphi 0, %s171
      %s188 = sphi 0, %s172
      %s192 = sphi 0, %s192
      %s194 = sphi 0, %s192
      %s195 = sphi 0, %s194
      %s209 = sphi 0, %s195
      %s215 = sphi 0, %s217
      %s218 = sphi 0, %s215
      %s219 = sphi 0, %s218
      %s235 = sphi 0, %s219
    $region4: #{tpu_custom_call.1} parent=1 // loop_header_branch
      %19 = sbr.rel (%p17) target = $region8
    $region5: #{tpu_custom_call.1} parent=1 // loop_body
      %s21 = ssub.s32 %s16, 1
      %s22 = ssub.s32 %s16, 2
      %s29 = sadd.s32 1, %s24
      %p30 = scmp.ge.s32.totalorder %s29, 4
      %s31 = scalar_select %p30, 0, %s29
      %s32 = sadd.s32 1, %s23
      %s33 = scalar_select %p30, %s32, %s23
      %p34 = scmp.ge.s32.totalorder %s33, 2
      %s35 = scalar_select %p34, 0, %s33
      %s36 = ssub.s32 %s23, %s35
      %p37 = scmp.eq.s32.totalorder %s36, 0
      %s39 = sadd.s32 %s38, 1
      %s40 = scalar_select %p37, %s38, %s39
      %p43 = pneg %p37
      %p44 = scmp.eq.s32.totalorder %s16, 7
      %p45 = por %p43, %p44
      %p46 = scmp.ne.s32.totalorder %s38, %s41
      %p47 = scmp.eq.s32.totalorder %s16, 0
      %p48 = por %p46, %p47
      %p49 = scmp.ne.s32.totalorder %s38, %s41
      %p50 = scmp.eq.s32.totalorder %s21, 7
      %p51 = por %p49, %p50
      %p52 = scmp.ne.s32.totalorder %s41, %s42
      %p53 = scmp.eq.s32.totalorder %s21, 0
      %p54 = por %p52, %p53
      %p55 = scmp.ne.s32.totalorder %s41, %s42
      %p56 = scmp.eq.s32.totalorder %s22, 7
      %p57 = por %p55, %p56
      %p59 = scmp.ne.s32.totalorder %s42, %s58
      %p60 = scmp.eq.s32.totalorder %s22, 0
      %p61 = por %p59, %p60
      %s62 = ssub.s32 %s23, %s35
      %p63 = scmp.eq.s32.totalorder %s62, 0
      %s65 = sadd.s32 %s64, 1
      %s66 = scalar_select %p63, %s64, %s65
      %p69 = pneg %p63
      %p70 = scmp.eq.s32.totalorder %s16, 7
      %p71 = por %p69, %p70
      %p72 = scmp.ne.s32.totalorder %s64, %s67
      %p73 = scmp.eq.s32.totalorder %s16, 0
      %p74 = por %p72, %p73
      %p75 = scmp.ne.s32.totalorder %s64, %s67
      %p76 = scmp.eq.s32.totalorder %s21, 7
      %p77 = por %p75, %p76
      %p78 = scmp.ne.s32.totalorder %s67, %s68
      %p79 = scmp.eq.s32.totalorder %s21, 0
      %p80 = por %p78, %p79
      %p81 = scmp.ne.s32.totalorder %s67, %s68
      %p82 = scmp.eq.s32.totalorder %s22, 7
      %p83 = por %p81, %p82
      %p85 = scmp.ne.s32.totalorder %s68, %s84
      %p86 = scmp.eq.s32.totalorder %s22, 0
      %p87 = por %p85, %p86
      %s88 = ssub.s32 %s24, %s31
      %p89 = scmp.eq.s32.totalorder %s88, 0
      %s91 = sadd.s32 %s90, 1
      %s92 = scalar_select %p89, %s90, %s91
      %p95 = pneg %p89
      %p96 = scmp.eq.s32.totalorder %s16, 7
      %p97 = por %p95, %p96
      %p98 = scmp.ne.s32.totalorder %s90, %s93
      %p99 = scmp.eq.s32.totalorder %s16, 0
      %p100 = por %p98, %p99
      %p101 = scmp.ne.s32.totalorder %s90, %s93
      %p102 = scmp.eq.s32.totalorder %s21, 7
      %p103 = por %p101, %p102
      %p104 = scmp.ne.s32.totalorder %s93, %s94
      %p105 = scmp.eq.s32.totalorder %s21, 0
      %p106 = por %p104, %p105
      %p107 = scmp.ne.s32.totalorder %s93, %s94
      %p108 = scmp.eq.s32.totalorder %s22, 7
      %p109 = por %p107, %p108
      %p111 = scmp.ne.s32.totalorder %s94, %s110
      %p112 = scmp.eq.s32.totalorder %s22, 0
      %p113 = por %p111, %p112
      %s114 = ssub.s32 %s24, %s31
      %p115 = scmp.eq.s32.totalorder %s114, 0
      %s117 = sadd.s32 %s116, 1
      %s118 = scalar_select %p115, %s116, %s117
      %p121 = pneg %p115
      %p122 = scmp.eq.s32.totalorder %s16, 7
      %p123 = por %p121, %p122
      %p124 = scmp.ne.s32.totalorder %s116, %s119
      %p125 = scmp.eq.s32.totalorder %s16, 0
      %p126 = por %p124, %p125
      %p127 = scmp.ne.s32.totalorder %s116, %s119
      %p128 = scmp.eq.s32.totalorder %s21, 7
      %p129 = por %p127, %p128
      %p130 = scmp.ne.s32.totalorder %s119, %s120
      %p131 = scmp.eq.s32.totalorder %s21, 0
      %p132 = por %p130, %p131
      %p133 = scmp.ne.s32.totalorder %s119, %s120
      %p134 = scmp.eq.s32.totalorder %s22, 7
      %p135 = por %p133, %p134
      %p137 = scmp.ne.s32.totalorder %s120, %s136
      %p138 = scmp.eq.s32.totalorder %s22, 0
      %p139 = por %p137, %p138
      %s140 = ssub.s32 %s24, %s31
      %p141 = scmp.eq.s32.totalorder %s140, 0
      %s143 = sadd.s32 %s142, 1
      %s144 = scalar_select %p141, %s142, %s143
      %p147 = pneg %p141
      %p148 = scmp.eq.s32.totalorder %s16, 7
      %p149 = por %p147, %p148
      %p150 = scmp.ne.s32.totalorder %s142, %s145
      %p151 = scmp.eq.s32.totalorder %s16, 0
      %p152 = por %p150, %p151
      %p153 = scmp.ne.s32.totalorder %s142, %s145
      %p154 = scmp.eq.s32.totalorder %s21, 7
      %p155 = por %p153, %p154
      %p156 = scmp.ne.s32.totalorder %s145, %s146
      %p157 = scmp.eq.s32.totalorder %s21, 0
      %p158 = por %p156, %p157
      %p159 = scmp.ne.s32.totalorder %s145, %s146
      %p160 = scmp.eq.s32.totalorder %s22, 7
      %p161 = por %p159, %p160
      %p163 = scmp.ne.s32.totalorder %s146, %s162
      %p164 = scmp.eq.s32.totalorder %s22, 0
      %p165 = por %p163, %p164
      %s166 = ssub.s32 %s24, %s31
      %p167 = scmp.eq.s32.totalorder %s166, 0
      %s169 = sadd.s32 %s168, 1
      %s170 = scalar_select %p167, %s168, %s169
      %p173 = pneg %p167
      %p174 = scmp.eq.s32.totalorder %s16, 7
      %p175 = por %p173, %p174
      %p176 = scmp.ne.s32.totalorder %s168, %s171
      %p177 = scmp.eq.s32.totalorder %s16, 0
      %p178 = por %p176, %p177
      %p179 = scmp.ne.s32.totalorder %s168, %s171
      %p180 = scmp.eq.s32.totalorder %s21, 7
      %p181 = por %p179, %p180
      %p182 = scmp.ne.s32.totalorder %s171, %s172
      %p183 = scmp.eq.s32.totalorder %s21, 0
      %p184 = por %p182, %p183
      %p185 = scmp.ne.s32.totalorder %s171, %s172
      %p186 = scmp.eq.s32.totalorder %s22, 7
      %p187 = por %p185, %p186
      %p189 = scmp.ne.s32.totalorder %s172, %s188
      %p190 = scmp.eq.s32.totalorder %s22, 0
      %p191 = por %p189, %p190
      %s193 = sadd.s32 %s192, 1
      %p196 = scmp.eq.s32.totalorder %s16, 7
      %p197 = scmp.ne.s32.totalorder %s192, %s194
      %p198 = scmp.eq.s32.totalorder %s16, 0
      %p199 = por %p197, %p198
      %p200 = scmp.ne.s32.totalorder %s192, %s194
      %p201 = scmp.eq.s32.totalorder %s21, 7
      %p202 = por %p200, %p201
      %p203 = scmp.ne.s32.totalorder %s194, %s195
      %p204 = scmp.eq.s32.totalorder %s21, 0
      %p205 = por %p203, %p204
      %p206 = scmp.ne.s32.totalorder %s194, %s195
      %p207 = scmp.eq.s32.totalorder %s22, 7
      %p208 = por %p206, %p207
      %p210 = scmp.ne.s32.totalorder %s195, %s209
      %p211 = scmp.eq.s32.totalorder %s22, 0
      %p212 = por %p210, %p211
      %s213 = ssub.s32 %s23, %s35
      %p214 = scmp.eq.s32.totalorder %s213, 0
      %s216 = sadd.s32 %s215, 1
      %s217 = scalar_select %p214, %s215, %s216
      %p220 = pneg %p214
      %p221 = scmp.eq.s32.totalorder %s16, 7
      %p222 = por %p220, %p221
      %p223 = scmp.ne.s32.totalorder %s215, %s218
      %p224 = scmp.eq.s32.totalorder %s16, 0
      %p225 = por %p223, %p224
      %p226 = scmp.ne.s32.totalorder %s215, %s218
      %p227 = scmp.eq.s32.totalorder %s21, 7
      %p228 = por %p226, %p227
      %p229 = scmp.ne.s32.totalorder %s218, %s219
      %p230 = scmp.eq.s32.totalorder %s21, 0
      %p231 = por %p229, %p230
      %p232 = scmp.ne.s32.totalorder %s218, %s219
      %p233 = scmp.eq.s32.totalorder %s22, 7
      %p234 = por %p232, %p233
      %p236 = scmp.ne.s32.totalorder %s219, %s235
      %p237 = scmp.eq.s32.totalorder %s22, 0
      %p238 = por %p236, %p237
      %p239 = scmp.le.s32.totalorder 1, %s16
      %p240 = scmp.lt.s32.totalorder %s16, 9
      %p241 = pnand %p239, %p240
      %p242 = pneg %p241
      // Predicated region
      $region9: #{tpu_custom_call.1} parent=5 // pred_check
        _
      $region10: #{tpu_custom_call.1} parent=5 // pred_check_branch
        %244 = sbr.rel (%p241) target = $region12
      $region11: #{tpu_custom_call.1} parent=5 // pred_region
        %s245 = ssub.s32 %s16, 1
        // Predicated region
        $region13: #{tpu_custom_call.1} parent=11 // pred_check
          %p246 = pneg %p205
        $region14: #{tpu_custom_call.1} parent=11 // pred_check_branch
          %248 = sbr.rel (%p246) target = $region16
        $region15: #{tpu_custom_call.1} parent=11 // pred_region
          _
        $region16: #{tpu_custom_call.1} parent=11 // pred_fallthru
          _
      $region12: #{tpu_custom_call.1} parent=5 // pred_fallthru
        _
      %p249 = scmp.lt.s32.totalorder %s16, 8
      // Predicated region
      $region17: #{tpu_custom_call.1} parent=5 // pred_check
        %p250 = pneg %p249
      $region18: #{tpu_custom_call.1} parent=5 // pred_check_branch
        %252 = sbr.rel (%p250) target = $region20
      $region19: #{tpu_custom_call.1} parent=5 // pred_region
        // Predicated region
        $region21: #{tpu_custom_call.1} parent=19 // pred_check
          %p253 = pneg %p48
        $region22: #{tpu_custom_call.1} parent=19 // pred_check_branch
          %255 = sbr.rel (%p253) target = $region24
        $region23: #{tpu_custom_call.1} parent=19 // pred_region
          %p256 = scmp.lt.s32.totalorder %s23, 1
          %s257 = scalar_select %p256, %s23, 1
          %s258 = smul.addr %s257, 2
          %s259 = smul.addr %s258, 4
          %s260 = scalar_lea.vmem %s0, %s259
        $region24: #{tpu_custom_call.1} parent=19 // pred_fallthru
          _
        // Predicated region
        $region25: #{tpu_custom_call.1} parent=19 // pred_check
          %p261 = pneg %p74
        $region26: #{tpu_custom_call.1} parent=19 // pred_check_branch
          %263 = sbr.rel (%p261) target = $region28
        $region27: #{tpu_custom_call.1} parent=19 // pred_region
          %p264 = scmp.lt.s32.totalorder %s23, 1
          %s265 = scalar_select %p264, %s23, 1
          %s266 = smul.addr %s265, 32
          %s267 = smul.addr %s266, 8
          %s268 = scalar_lea.vmem %s1, %s267
        $region28: #{tpu_custom_call.1} parent=19 // pred_fallthru
          _
        // Predicated region
        $region29: #{tpu_custom_call.1} parent=19 // pred_check
          %p269 = pneg %p100
        $region30: #{tpu_custom_call.1} parent=19 // pred_check_branch
          %271 = sbr.rel (%p269) target = $region32
        $region31: #{tpu_custom_call.1} parent=19 // pred_region
          %p272 = scmp.lt.s32.totalorder %s24, 3
          %s273 = scalar_select %p272, %s24, 3
          %s274 = smul.addr %s273, 4
          %s275 = smul.addr %s274, 8
          %s276 = scalar_lea.vmem %s2, %s275
        $region32: #{tpu_custom_call.1} parent=19 // pred_fallthru
          _
        // Predicated region
        $region33: #{tpu_custom_call.1} parent=19 // pred_check
          %p277 = pneg %p126
        $region34: #{tpu_custom_call.1} parent=19 // pred_check_branch
          %279 = sbr.rel (%p277) target = $region36
        $region35: #{tpu_custom_call.1} parent=19 // pred_region
          %p280 = scmp.lt.s32.totalorder %s24, 3
          %s281 = scalar_select %p280, %s24, 3
          %s282 = smul.addr %s281, 4
          %s283 = scalar_lea.vmem %s3, %s282
        $region36: #{tpu_custom_call.1} parent=19 // pred_fallthru
          _
        // Predicated region
        $region37: #{tpu_custom_call.1} parent=19 // pred_check
          %p284 = pneg %p152
        $region38: #{tpu_custom_call.1} parent=19 // pred_check_branch
          %286 = sbr.rel (%p284) target = $region40
        $region39: #{tpu_custom_call.1} parent=19 // pred_region
          %p287 = scmp.lt.s32.totalorder %s24, 3
          %s288 = scalar_select %p287, %s24, 3
          %s289 = smul.addr %s288, 4
          %s290 = smul.addr %s289, 8
          %s291 = scalar_lea.vmem %s4, %s290
        $region40: #{tpu_custom_call.1} parent=19 // pred_fallthru
          _
        // Predicated region
        $region41: #{tpu_custom_call.1} parent=19 // pred_check
          %p292 = pneg %p178
        $region42: #{tpu_custom_call.1} parent=19 // pred_check_branch
          %294 = sbr.rel (%p292) target = $region44
        $region43: #{tpu_custom_call.1} parent=19 // pred_region
          %p295 = scmp.lt.s32.totalorder %s24, 3
          %s296 = scalar_select %p295, %s24, 3
          %s297 = smul.addr %s296, 4
          %s298 = scalar_lea.vmem %s5, %s297
        $region44: #{tpu_custom_call.1} parent=19 // pred_fallthru
          _
      $region20: #{tpu_custom_call.1} parent=5 // pred_fallthru
        _
      %p299 = scmp.le.s32.totalorder 1, %s16
      %p300 = scmp.lt.s32.totalorder %s16, 9
      %p301 = pnand %p299, %p300
      %p302 = pneg %p301
      // Predicated region
      $region45: #{tpu_custom_call.1} parent=5 // pred_check
        _
      $region46: #{tpu_custom_call.1} parent=5 // pred_check_branch
        %304 = sbr.rel (%p301) target = $region48
      $region47: #{tpu_custom_call.1} parent=5 // pred_region
        %s305 = ssub.s32 %s16, 1
        %p306 = scmp.lt.s32.totalorder %s25, 1
        %s307 = scalar_select %p306, %s25, 1
        %s308 = smul.addr %s307, 2
        %s309 = smul.addr %s308, 4
        %s310 = scalar_lea.vmem %s0, %s309
        %p311 = pneg %p54
        %p312 = pneg %p51
        %p313 = scmp.lt.s32.totalorder %s25, 1
        %s314 = scalar_select %p313, %s25, 1
        %s315 = smul.addr %s314, 32
        %s316 = smul.addr %s315, 8
        %s317 = scalar_lea.vmem %s1, %s316
        %p318 = pneg %p80
        %p319 = pneg %p77
        %p320 = scmp.lt.s32.totalorder %s26, 3
        %s321 = scalar_select %p320, %s26, 3
        %s322 = smul.addr %s321, 4
        %s323 = smul.addr %s322, 8
        %s324 = scalar_lea.vmem %s2, %s323
        %p325 = pneg %p106
        %p326 = pneg %p103
        %p327 = scmp.lt.s32.totalorder %s26, 3
        %s328 = scalar_select %p327, %s26, 3
        %s329 = smul.addr %s328, 4
        %s330 = scalar_lea.vmem %s3, %s329
        %p331 = pneg %p132
        %p332 = pneg %p129
        %p333 = scmp.lt.s32.totalorder %s26, 3
        %s334 = scalar_select %p333, %s26, 3
        %s335 = smul.addr %s334, 4
        %s336 = smul.addr %s335, 8
        %s337 = scalar_lea.vmem %s4, %s336
        %p338 = pneg %p158
        %p339 = pneg %p155
        %p340 = scmp.lt.s32.totalorder %s26, 3
        %s341 = scalar_select %p340, %s26, 3
        %s342 = smul.addr %s341, 4
        %s343 = scalar_lea.vmem %s5, %s342
        %p344 = pneg %p184
        %p345 = pneg %p181
        %p346 = pneg %p205
        %p347 = pneg %p202
        %p348 = pneg %p231
        %p349 = pneg %p228
        %s350 = sand.u32 %s218, 1
        %s351 = scalar_lea.sflag [#allocation3], %s350
        %s352 = sand.u32 %s218, 1
        %s353 = smul.addr %s352, 8
        %s354 = scalar_lea.vmem [#allocation2], %s353
        %p355 = scmp.lt.s32.totalorder %s25, 1
        %s356 = scalar_select %p355, %s25, 1
        %s357 = smul.addr %s356, 2
        %s358 = smul.addr %s357, 4
        %s359 = scalar_lea.vmem %s0, %s358
        %p360 = scmp.lt.s32.totalorder %s25, 1
        %s361 = scalar_select %p360, %s25, 1
        %s362 = smul.addr %s361, 32
        %s363 = smul.addr %s362, 8
        %s364 = scalar_lea.vmem %s1, %s363
        %p365 = scmp.lt.s32.totalorder %s26, 3
        %s366 = scalar_select %p365, %s26, 3
        %s367 = smul.addr %s366, 4
        %s368 = smul.addr %s367, 8
        %s369 = scalar_lea.vmem %s2, %s368
        %p370 = scmp.lt.s32.totalorder %s26, 3
        %s371 = scalar_select %p370, %s26, 3
        %s372 = smul.addr %s371, 4
        %s373 = scalar_lea.vmem %s3, %s372
        %p374 = scmp.lt.s32.totalorder %s26, 3
        %s375 = scalar_select %p374, %s26, 3
        %s376 = smul.addr %s375, 4
        %s377 = smul.addr %s376, 8
        %s378 = scalar_lea.vmem %s4, %s377
        %p379 = scmp.lt.s32.totalorder %s26, 3
        %s380 = scalar_select %p379, %s26, 3
        %s381 = smul.addr %s380, 4
        %s382 = scalar_lea.vmem %s5, %s381
        %v384 = vld [vmem:[%s359] sm:$0xff]
        %v385 = vld [vmem:[%s364] sm:$0xff]
        %v386 = vld [vmem:[%s364 + $0x8] sm:$0xff]
        %v387 = vld [vmem:[%s364 + $0x10] sm:$0xff]
        %v388 = vld [vmem:[%s364 + $0x18] sm:$0xff]
        %v389 = vld [vmem:[%s364 + $0x20] sm:$0xff]
        %v390 = vld [vmem:[%s364 + $0x28] sm:$0xff]
        %v391 = vld [vmem:[%s364 + $0x30] sm:$0xff]
        %v392 = vld [vmem:[%s364 + $0x38] sm:$0xff]
        %v393 = vld [vmem:[%s364 + $0x40] sm:$0xff]
        %v394 = vld [vmem:[%s364 + $0x48] sm:$0xff]
        %v395 = vld [vmem:[%s364 + $0x50] sm:$0xff]
        %v396 = vld [vmem:[%s364 + $0x58] sm:$0xff]
        %v397 = vld [vmem:[%s364 + $0x60] sm:$0xff]
        %v398 = vld [vmem:[%s364 + $0x68] sm:$0xff]
        %v399 = vld [vmem:[%s364 + $0x70] sm:$0xff]
        %v400 = vld [vmem:[%s364 + $0x78] sm:$0xff]
        %v401 = vld [vmem:[%s364 + $0x80] sm:$0xff]
        %v402 = vld [vmem:[%s364 + $0x88] sm:$0xff]
        %v403 = vld [vmem:[%s364 + $0x90] sm:$0xff]
        %v404 = vld [vmem:[%s364 + $0x98] sm:$0xff]
        %v405 = vld [vmem:[%s364 + $0xa0] sm:$0xff]
        %v406 = vld [vmem:[%s364 + $0xa8] sm:$0xff]
        %v407 = vld [vmem:[%s364 + $0xb0] sm:$0xff]
        %v408 = vld [vmem:[%s364 + $0xb8] sm:$0xff]
        %v409 = vld [vmem:[%s364 + $0xc0] sm:$0xff]
        %v410 = vld [vmem:[%s364 + $0xc8] sm:$0xff]
        %v411 = vld [vmem:[%s364 + $0xd0] sm:$0xff]
        %v412 = vld [vmem:[%s364 + $0xd8] sm:$0xff]
        %v413 = vld [vmem:[%s364 + $0xe0] sm:$0xff]
        %v414 = vld [vmem:[%s364 + $0xe8] sm:$0xff]
        %v415 = vld [vmem:[%s364 + $0xf0] sm:$0xff]
        %v416 = vld [vmem:[%s364 + $0xf8] sm:$0xff]
        %v417 = vld [vmem:[%s369] sm:$0xff]
        %v418 = vld [vmem:[%s369 + $0x8] sm:$0xff]
        %v419 = vld [vmem:[%s369 + $0x10] sm:$0xff]
        %v420 = vld [vmem:[%s369 + $0x18] sm:$0xff]
        %v422 = vcombine.high %v384, %v384
        %vm423 = vcmask 31744
        %v425 = vsel %vm423, %v417, 0
        %v428 = vsel %vm423, %v418, 0
        %v431 = vsel %vm423, %v419, 0
        %v434 = vsel %vm423, %v420, 0
        %vm436 = vcmask 1043456
        %v437 = vsel %vm436, %v384, 0
        %v439 = vsel %vm436, %v422, 0
        %441 = vmatprep.subr.mxu0 %v439
        %442 = vmatpush1.msra.mxu0 %v437
        %443 = vmatprep.subr.mxu0 0.0
        %444 = vmatpush1.msra.mxu0 0.0
        %445 = vmatprep.subr.mxu0 0.0
        %446 = vmatpush1.msra.mxu0 0.0
        %447 = vmatprep.subr.mxu0 0.0
        %448 = vmatpush1.msra.mxu0 0.0
        %449 = vmatprep.subr.mxu0 0.0
        %450 = vmatpush1.msra.mxu0 0.0
        %451 = vmatprep.subr.mxu0 0.0
        %452 = vmatpush1.msra.mxu0 0.0
        %453 = vmatprep.subr.mxu0 0.0
        %454 = vmatpush1.msra.mxu0 0.0
        %455 = vmatprep.subr.mxu0 0.0
        %456 = vmatpush1.msra.mxu0 0.0
        %457 = vmatprep.subr.mxu0 0.0
        %458 = vmatpush1.msra.mxu0 0.0
        %459 = vmatprep.subr.mxu0 0.0
        %460 = vmatpush1.msra.mxu0 0.0
        %461 = vmatprep.subr.mxu0 0.0
        %462 = vmatpush1.msra.mxu0 0.0
        %463 = vmatprep.subr.mxu0 0.0
        %464 = vmatpush1.msra.mxu0 0.0
        %465 = vmatprep.subr.mxu0 0.0
        %466 = vmatpush1.msra.mxu0 0.0
        %467 = vmatprep.subr.mxu0 0.0
        %468 = vmatpush1.msra.mxu0 0.0
        %469 = vmatprep.subr.mxu0 0.0
        %470 = vmatpush1.msra.mxu0 0.0
        %471 = vmatprep.subr.mxu0 0.0
        %472 = vmatpush1.msra.mxu0 0.0
        %473 = vmatprep.subr.mxu0 0.0
        %474 = vmatpush1.msra.mxu0 0.0
        %475 = vmatprep.subr.mxu0 0.0
        %476 = vmatpush1.msra.mxu0 0.0
        %477 = vmatprep.subr.mxu0 0.0
        %478 = vmatpush1.msra.mxu0 0.0
        %479 = vmatprep.subr.mxu0 0.0
        %480 = vmatpush1.msra.mxu0 0.0
        %481 = vmatprep.subr.mxu0 0.0
        %482 = vmatpush1.msra.mxu0 0.0
        %483 = vmatprep.subr.mxu0 0.0
        %484 = vmatpush1.msra.mxu0 0.0
        %485 = vmatprep.subr.mxu0 0.0
        %486 = vmatpush1.msra.mxu0 0.0
        %487 = vmatprep.subr.mxu0 0.0
        %488 = vmatpush1.msra.mxu0 0.0
        %489 = vmatprep.subr.mxu0 0.0
        %490 = vmatpush1.msra.mxu0 0.0
        %491 = vmatprep.subr.mxu0 0.0
        %492 = vmatpush1.msra.mxu0 0.0
        %493 = vmatprep.subr.mxu0 0.0
        %494 = vmatpush1.msra.mxu0 0.0
        %495 = vmatprep.subr.mxu0 0.0
        %496 = vmatpush1.msra.mxu0 0.0
        %497 = vmatprep.subr.mxu0 0.0
        %498 = vmatpush1.msra.mxu0 0.0
        %499 = vmatprep.subr.mxu0 0.0
        %500 = vmatpush1.msra.mxu0 0.0
        %501 = vmatprep.subr.mxu0 0.0
        %502 = vmatpush1.msra.mxu0 0.0
        %503 = vmatprep.subr.mxu0 0.0
        %504 = vmatpush1.msra.mxu0 0.0
        %505 = vmatprep.mubr.f32.mxu0 0.0
        %506 = vmatmul.mubr.f32.gmra.mrb[0].mxu0 %v425
        %v507 = vpop.f32.mrb[0].mxu0
        %v508 = vadd.f32 0.0, %v507
        %v509 = vpop.f32.mrb[0].mxu0
        %v510 = vadd.f32 0.0, %v509
        %511 = vmatprep.mubr.f32.mxu0 0.0
        %512 = vmatmul.mubr.f32.gmra.mrb[0].mxu0 %v428
        %v513 = vpop.f32.mrb[0].mxu0
        %v514 = vadd.f32 0.0, %v513
        %v515 = vpop.f32.mrb[0].mxu0
        %v516 = vadd.f32 0.0, %v515
        %517 = vmatprep.mubr.f32.mxu0 0.0
        %518 = vmatmul.mubr.f32.gmra.mrb[0].mxu0 %v431
        %v519 = vpop.f32.mrb[0].mxu0
        %v520 = vadd.f32 0.0, %v519
        %v521 = vpop.f32.mrb[0].mxu0
        %v522 = vadd.f32 0.0, %v521
        %523 = vmatprep.mubr.f32.mxu0 0.0
        %524 = vmatmul.mubr.f32.gmra.mrb[0].mxu0 %v434
        %v525 = vpop.f32.mrb[0].mxu0
        %v526 = vadd.f32 0.0, %v525
        %v527 = vpop.f32.mrb[0].mxu0
        %v528 = vadd.f32 0.0, %v527
        %529 = vdwg.mxu0
        %v530 = vld [vmem:[%s378] sm:$0xff]
        %v531 = vld [vmem:[%s378 + $0x8] sm:$0xff]
        %v532 = vld [vmem:[%s378 + $0x10] sm:$0xff]
        %v533 = vld [vmem:[%s378 + $0x18] sm:$0xff]
        %v535 = vsel %vm423, %v530, 0
        %v538 = vsel %vm423, %v531, 0
        %v541 = vsel %vm423, %v532, 0
        %v544 = vsel %vm423, %v533, 0
        %546 = vmatprep.subr.mxu0 %v439
        %547 = vmatpush1.msra.mxu0 %v437
        %548 = vmatprep.subr.mxu0 0.0
        %549 = vmatpush1.msra.mxu0 0.0
        %550 = vmatprep.subr.mxu0 0.0
        %551 = vmatpush1.msra.mxu0 0.0
        %552 = vmatprep.subr.mxu0 0.0
        %553 = vmatpush1.msra.mxu0 0.0
        %554 = vmatprep.subr.mxu0 0.0
        %555 = vmatpush1.msra.mxu0 0.0
        %556 = vmatprep.subr.mxu0 0.0
        %557 = vmatpush1.msra.mxu0 0.0
        %558 = vmatprep.subr.mxu0 0.0
        %559 = vmatpush1.msra.mxu0 0.0
        %560 = vmatprep.subr.mxu0 0.0
        %561 = vmatpush1.msra.mxu0 0.0
        %562 = vmatprep.subr.mxu0 0.0
        %563 = vmatpush1.msra.mxu0 0.0
        %564 = vmatprep.subr.mxu0 0.0
        %565 = vmatpush1.msra.mxu0 0.0
        %566 = vmatprep.subr.mxu0 0.0
        %567 = vmatpush1.msra.mxu0 0.0
        %568 = vmatprep.subr.mxu0 0.0
        %569 = vmatpush1.msra.mxu0 0.0
        %570 = vmatprep.subr.mxu0 0.0
        %571 = vmatpush1.msra.mxu0 0.0
        %572 = vmatprep.subr.mxu0 0.0
        %573 = vmatpush1.msra.mxu0 0.0
        %574 = vmatprep.subr.mxu0 0.0
        %575 = vmatpush1.msra.mxu0 0.0
        %576 = vmatprep.subr.mxu0 0.0
        %577 = vmatpush1.msra.mxu0 0.0
        %578 = vmatprep.subr.mxu0 0.0
        %579 = vmatpush1.msra.mxu0 0.0
        %580 = vmatprep.subr.mxu0 0.0
        %581 = vmatpush1.msra.mxu0 0.0
        %582 = vmatprep.subr.mxu0 0.0
        %583 = vmatpush1.msra.mxu0 0.0
        %584 = vmatprep.subr.mxu0 0.0
        %585 = vmatpush1.msra.mxu0 0.0
        %586 = vmatprep.subr.mxu0 0.0
        %587 = vmatpush1.msra.mxu0 0.0
        %588 = vmatprep.subr.mxu0 0.0
        %589 = vmatpush1.msra.mxu0 0.0
        %590 = vmatprep.subr.mxu0 0.0
        %591 = vmatpush1.msra.mxu0 0.0
        %592 = vmatprep.subr.mxu0 0.0
        %593 = vmatpush1.msra.mxu0 0.0
        %594 = vmatprep.subr.mxu0 0.0
        %595 = vmatpush1.msra.mxu0 0.0
        %596 = vmatprep.subr.mxu0 0.0
        %597 = vmatpush1.msra.mxu0 0.0
        %598 = vmatprep.subr.mxu0 0.0
        %599 = vmatpush1.msra.mxu0 0.0
        %600 = vmatprep.subr.mxu0 0.0
        %601 = vmatpush1.msra.mxu0 0.0
        %602 = vmatprep.subr.mxu0 0.0
        %603 = vmatpush1.msra.mxu0 0.0
        %604 = vmatprep.subr.mxu0 0.0
        %605 = vmatpush1.msra.mxu0 0.0
        %606 = vmatprep.subr.mxu0 0.0
        %607 = vmatpush1.msra.mxu0 0.0
        %608 = vmatprep.subr.mxu0 0.0
        %609 = vmatpush1.msra.mxu0 0.0
        %610 = vmatprep.mubr.f32.mxu0 0.0
        %611 = vmatmul.mubr.f32.gmra.mrb[0].mxu0 %v535
        %v612 = vpop.f32.mrb[0].mxu0
        %v613 = vadd.f32 0.0, %v612
        %v614 = vpop.f32.mrb[0].mxu0
        %v615 = vadd.f32 0.0, %v614
        %616 = vmatprep.mubr.f32.mxu0 0.0
        %617 = vmatmul.mubr.f32.gmra.mrb[0].mxu0 %v538
        %v618 = vpop.f32.mrb[0].mxu0
        %v619 = vadd.f32 0.0, %v618
        %v620 = vpop.f32.mrb[0].mxu0
        %v621 = vadd.f32 0.0, %v620
        %622 = vmatprep.mubr.f32.mxu0 0.0
        %623 = vmatmul.mubr.f32.gmra.mrb[0].mxu0 %v541
        %v624 = vpop.f32.mrb[0].mxu0
        %v625 = vadd.f32 0.0, %v624
        %v626 = vpop.f32.mrb[0].mxu0
        %v627 = vadd.f32 0.0, %v626
        %628 = vmatprep.mubr.f32.mxu0 0.0
        %629 = vmatmul.mubr.f32.gmra.mrb[0].mxu0 %v544
        %v630 = vpop.f32.mrb[0].mxu0
        %v631 = vadd.f32 0.0, %v630
        %v632 = vpop.f32.mrb[0].mxu0
        %v633 = vadd.f32 0.0, %v632
        %634 = vdwg.mxu0
        %v635 = vld [vmem:[%s373] sm:$0xf]
        %v637 = vsel %vm423, %v385, 0
        %v640 = vsel %vm423, %v386, 0
        %v643 = vsel %vm423, %v387, 0
        %v646 = vsel %vm423, %v388, 0
        %v649 = vsel %vm423, %v389, 0
        %v652 = vsel %vm423, %v390, 0
        %v655 = vsel %vm423, %v391, 0
        %v658 = vsel %vm423, %v392, 0
        %v661 = vsel %vm423, %v393, 0
        %v664 = vsel %vm423, %v394, 0
        %v667 = vsel %vm423, %v395, 0
        %v670 = vsel %vm423, %v396, 0
        %v673 = vsel %vm423, %v397, 0
        %v676 = vsel %vm423, %v398, 0
        %v679 = vsel %vm423, %v399, 0
        %v682 = vsel %vm423, %v400, 0
        %v685 = vsel %vm423, %v401, 0
        %v688 = vsel %vm423, %v402, 0
        %v691 = vsel %vm423, %v403, 0
        %v694 = vsel %vm423, %v404, 0
        %v697 = vsel %vm423, %v405, 0
        %v700 = vsel %vm423, %v406, 0
        %v703 = vsel %vm423, %v407, 0
        %v706 = vsel %vm423, %v408, 0
        %v709 = vsel %vm423, %v409, 0
        %v712 = vsel %vm423, %v410, 0
        %v715 = vsel %vm423, %v411, 0
        %v718 = vsel %vm423, %v412, 0
        %v721 = vsel %vm423, %v413, 0
        %v724 = vsel %vm423, %v414, 0
        %v727 = vsel %vm423, %v415, 0
        %v730 = vsel %vm423, %v416, 0
        %v733 = vsel %vm436, %v635, 0
        %735 = vmatprep.subr.mxu0 0.0
        %736 = vmatpush1.msra.mxu0 %v733
        %737 = vmatprep.subr.mxu0 0.0
        %738 = vmatpush1.msra.mxu0 0.0
        %739 = vmatprep.subr.mxu0 0.0
        %740 = vmatpush1.msra.mxu0 0.0
        %741 = vmatprep.subr.mxu0 0.0
        %742 = vmatpush1.msra.mxu0 0.0
        %743 = vmatprep.subr.mxu0 0.0
        %744 = vmatpush1.msra.mxu0 0.0
        %745 = vmatprep.subr.mxu0 0.0
        %746 = vmatpush1.msra.mxu0 0.0
        %747 = vmatprep.subr.mxu0 0.0
        %748 = vmatpush1.msra.mxu0 0.0
        %749 = vmatprep.subr.mxu0 0.0
        %750 = vmatpush1.msra.mxu0 0.0
        %751 = vmatprep.subr.mxu0 0.0
        %752 = vmatpush1.msra.mxu0 0.0
        %753 = vmatprep.subr.mxu0 0.0
        %754 = vmatpush1.msra.mxu0 0.0
        %755 = vmatprep.subr.mxu0 0.0
        %756 = vmatpush1.msra.mxu0 0.0
        %757 = vmatprep.subr.mxu0 0.0
        %758 = vmatpush1.msra.mxu0 0.0
        %759 = vmatprep.subr.mxu0 0.0
        %760 = vmatpush1.msra.mxu0 0.0
        %761 = vmatprep.subr.mxu0 0.0
        %762 = vmatpush1.msra.mxu0 0.0
        %763 = vmatprep.subr.mxu0 0.0
        %764 = vmatpush1.msra.mxu0 0.0
        %765 = vmatprep.subr.mxu0 0.0
        %766 = vmatpush1.msra.mxu0 0.0
        %767 = vmatprep.subr.mxu0 0.0
        %768 = vmatpush1.msra.mxu0 0.0
        %769 = vmatprep.subr.mxu0 0.0
        %770 = vmatpush1.msra.mxu0 0.0
        %771 = vmatprep.subr.mxu0 0.0
        %772 = vmatpush1.msra.mxu0 0.0
        %773 = vmatprep.subr.mxu0 0.0
        %774 = vmatpush1.msra.mxu0 0.0
        %775 = vmatprep.subr.mxu0 0.0
        %776 = vmatpush1.msra.mxu0 0.0
        %777 = vmatprep.subr.mxu0 0.0
        %778 = vmatpush1.msra.mxu0 0.0
        %779 = vmatprep.subr.mxu0 0.0
        %780 = vmatpush1.msra.mxu0 0.0
        %781 = vmatprep.subr.mxu0 0.0
        %782 = vmatpush1.msra.mxu0 0.0
        %783 = vmatprep.subr.mxu0 0.0
        %784 = vmatpush1.msra.mxu0 0.0
        %785 = vmatprep.subr.mxu0 0.0
        %786 = vmatpush1.msra.mxu0 0.0
        %787 = vmatprep.subr.mxu0 0.0
        %788 = vmatpush1.msra.mxu0 0.0
        %789 = vmatprep.subr.mxu0 0.0
        %790 = vmatpush1.msra.mxu0 0.0
        %791 = vmatprep.subr.mxu0 0.0
        %792 = vmatpush1.msra.mxu0 0.0
        %793 = vmatprep.subr.mxu0 0.0
        %794 = vmatpush1.msra.mxu0 0.0
        %795 = vmatprep.subr.mxu0 0.0
        %796 = vmatpush1.msra.mxu0 0.0
        %797 = vmatprep.subr.mxu0 0.0
        %798 = vmatpush1.msra.mxu0 0.0
        %799 = vmatprep.mubr.f32.mxu0 0.0
        %800 = vmatmul.mubr.f32.gmra.mrb[0].mxu0 %v637
        %v801 = vpop.f32.mrb[0].mxu0
        %v802 = vadd.f32 0.0, %v801
        %v803 = vpop.f32.mrb[0].mxu0
        %804 = vmatprep.mubr.f32.mxu0 0.0
        %805 = vmatmul.mubr.f32.gmra.mrb[0].mxu0 %v640
        %v806 = vpop.f32.mrb[0].mxu0
        %v807 = vadd.f32 0.0, %v806
        %v808 = vpop.f32.mrb[0].mxu0
        %809 = vmatprep.mubr.f32.mxu0 0.0
        %810 = vmatmul.mubr.f32.gmra.mrb[0].mxu0 %v643
        %v811 = vpop.f32.mrb[0].mxu0
        %v812 = vadd.f32 0.0, %v811
        %v813 = vpop.f32.mrb[0].mxu0
        %814 = vmatprep.mubr.f32.mxu0 0.0
        %815 = vmatmul.mubr.f32.gmra.mrb[0].mxu0 %v646
        %v816 = vpop.f32.mrb[0].mxu0
        %v817 = vadd.f32 0.0, %v816
        %v818 = vpop.f32.mrb[0].mxu0
        %819 = vmatprep.mubr.f32.mxu0 0.0
        %820 = vmatmul.mubr.f32.gmra.mrb[0].mxu0 %v649
        %v821 = vpop.f32.mrb[0].mxu0
        %v822 = vadd.f32 0.0, %v821
        %v823 = vpop.f32.mrb[0].mxu0
        %824 = vmatprep.mubr.f32.mxu0 0.0
        %825 = vmatmul.mubr.f32.gmra.mrb[0].mxu0 %v652
        %v826 = vpop.f32.mrb[0].mxu0
        %v827 = vadd.f32 0.0, %v826
        %v828 = vpop.f32.mrb[0].mxu0
        %829 = vmatprep.mubr.f32.mxu0 0.0
        %830 = vmatmul.mubr.f32.gmra.mrb[0].mxu0 %v655
        %v831 = vpop.f32.mrb[0].mxu0
        %v832 = vadd.f32 0.0, %v831
        %v833 = vpop.f32.mrb[0].mxu0
        %834 = vmatprep.mubr.f32.mxu0 0.0
        %835 = vmatmul.mubr.f32.gmra.mrb[0].mxu0 %v658
        %v836 = vpop.f32.mrb[0].mxu0
        %v837 = vadd.f32 0.0, %v836
        %v838 = vpop.f32.mrb[0].mxu0
        %839 = vmatprep.mubr.f32.mxu0 0.0
        %840 = vmatmul.mubr.f32.gmra.mrb[0].mxu0 %v661
        %v841 = vpop.f32.mrb[0].mxu0
        %v842 = vadd.f32 0.0, %v841
        %v843 = vpop.f32.mrb[0].mxu0
        %844 = vmatprep.mubr.f32.mxu0 0.0
        %845 = vmatmul.mubr.f32.gmra.mrb[0].mxu0 %v664
        %v846 = vpop.f32.mrb[0].mxu0
        %v847 = vadd.f32 0.0, %v846
        %v848 = vpop.f32.mrb[0].mxu0
        %849 = vmatprep.mubr.f32.mxu0 0.0
        %850 = vmatmul.mubr.f32.gmra.mrb[0].mxu0 %v667
        %v851 = vpop.f32.mrb[0].mxu0
        %v852 = vadd.f32 0.0, %v851
        %v853 = vpop.f32.mrb[0].mxu0
        %854 = vmatprep.mubr.f32.mxu0 0.0
        %855 = vmatmul.mubr.f32.gmra.mrb[0].mxu0 %v670
        %v856 = vpop.f32.mrb[0].mxu0
        %v857 = vadd.f32 0.0, %v856
        %v858 = vpop.f32.mrb[0].mxu0
        %859 = vmatprep.mubr.f32.mxu0 0.0
        %860 = vmatmul.mubr.f32.gmra.mrb[0].mxu0 %v673
        %v861 = vpop.f32.mrb[0].mxu0
        %v862 = vadd.f32 0.0, %v861
        %v863 = vpop.f32.mrb[0].mxu0
        %864 = vmatprep.mubr.f32.mxu0 0.0
        %865 = vmatmul.mubr.f32.gmra.mrb[0].mxu0 %v676
        %v866 = vpop.f32.mrb[0].mxu0
        %v867 = vadd.f32 0.0, %v866
        %v868 = vpop.f32.mrb[0].mxu0
        %869 = vmatprep.mubr.f32.mxu0 0.0
        %870 = vmatmul.mubr.f32.gmra.mrb[0].mxu0 %v679
        %v871 = vpop.f32.mrb[0].mxu0
        %v872 = vadd.f32 0.0, %v871
        %v873 = vpop.f32.mrb[0].mxu0
        %874 = vmatprep.mubr.f32.mxu0 0.0
        %875 = vmatmul.mubr.f32.gmra.mrb[0].mxu0 %v682
        %v876 = vpop.f32.mrb[0].mxu0
        %v877 = vadd.f32 0.0, %v876
        %v878 = vpop.f32.mrb[0].mxu0
        %879 = vmatprep.mubr.f32.mxu0 0.0
        %880 = vmatmul.mubr.f32.gmra.mrb[0].mxu0 %v685
        %v881 = vpop.f32.mrb[0].mxu0
        %v882 = vadd.f32 0.0, %v881
        %v883 = vpop.f32.mrb[0].mxu0
        %884 = vmatprep.mubr.f32.mxu0 0.0
        %885 = vmatmul.mubr.f32.gmra.mrb[0].mxu0 %v688
        %v886 = vpop.f32.mrb[0].mxu0
        %v887 = vadd.f32 0.0, %v886
        %v888 = vpop.f32.mrb[0].mxu0
        %889 = vmatprep.mubr.f32.mxu0 0.0
        %890 = vmatmul.mubr.f32.gmra.mrb[0].mxu0 %v691
        %v891 = vpop.f32.mrb[0].mxu0
        %v892 = vadd.f32 0.0, %v891
        %v893 = vpop.f32.mrb[0].mxu0
        %894 = vmatprep.mubr.f32.mxu0 0.0
        %895 = vmatmul.mubr.f32.gmra.mrb[0].mxu0 %v694
        %v896 = vpop.f32.mrb[0].mxu0
        %v897 = vadd.f32 0.0, %v896
        %v898 = vpop.f32.mrb[0].mxu0
        %899 = vmatprep.mubr.f32.mxu0 0.0
        %900 = vmatmul.mubr.f32.gmra.mrb[0].mxu0 %v697
        %v901 = vpop.f32.mrb[0].mxu0
        %v902 = vadd.f32 0.0, %v901
        %v903 = vpop.f32.mrb[0].mxu0
        %904 = vmatprep.mubr.f32.mxu0 0.0
        %905 = vmatmul.mubr.f32.gmra.mrb[0].mxu0 %v700
        %v906 = vpop.f32.mrb[0].mxu0
        %v907 = vadd.f32 0.0, %v906
        %v908 = vpop.f32.mrb[0].mxu0
        %909 = vmatprep.mubr.f32.mxu0 0.0
        %910 = vmatmul.mubr.f32.gmra.mrb[0].mxu0 %v703
        %v911 = vpop.f32.mrb[0].mxu0
        %v912 = vadd.f32 0.0, %v911
        %v913 = vpop.f32.mrb[0].mxu0
        %914 = vmatprep.mubr.f32.mxu0 0.0
        %915 = vmatmul.mubr.f32.gmra.mrb[0].mxu0 %v706
        %v916 = vpop.f32.mrb[0].mxu0
        %v917 = vadd.f32 0.0, %v916
        %v918 = vpop.f32.mrb[0].mxu0
        %919 = vmatprep.mubr.f32.mxu0 0.0
        %920 = vmatmul.mubr.f32.gmra.mrb[0].mxu0 %v709
        %v921 = vpop.f32.mrb[0].mxu0
        %v922 = vadd.f32 0.0, %v921
        %v923 = vpop.f32.mrb[0].mxu0
        %924 = vmatprep.mubr.f32.mxu0 0.0
        %925 = vmatmul.mubr.f32.gmra.mrb[0].mxu0 %v712
        %v926 = vpop.f32.mrb[0].mxu0
        %v927 = vadd.f32 0.0, %v926
        %v928 = vpop.f32.mrb[0].mxu0
        %929 = vmatprep.mubr.f32.mxu0 0.0
        %930 = vmatmul.mubr.f32.gmra.mrb[0].mxu0 %v715
        %v931 = vpop.f32.mrb[0].mxu0
        %v932 = vadd.f32 0.0, %v931
        %v933 = vpop.f32.mrb[0].mxu0
        %934 = vmatprep.mubr.f32.mxu0 0.0
        %935 = vmatmul.mubr.f32.gmra.mrb[0].mxu0 %v718
        %v936 = vpop.f32.mrb[0].mxu0
        %v937 = vadd.f32 0.0, %v936
        %v938 = vpop.f32.mrb[0].mxu0
        %939 = vmatprep.mubr.f32.mxu0 0.0
        %940 = vmatmul.mubr.f32.gmra.mrb[0].mxu0 %v721
        %v941 = vpop.f32.mrb[0].mxu0
        %v942 = vadd.f32 0.0, %v941
        %v943 = vpop.f32.mrb[0].mxu0
        %944 = vmatprep.mubr.f32.mxu0 0.0
        %945 = vmatmul.mubr.f32.gmra.mrb[0].mxu0 %v724
        %v946 = vpop.f32.mrb[0].mxu0
        %v947 = vadd.f32 0.0, %v946
        %v948 = vpop.f32.mrb[0].mxu0
        %949 = vmatprep.mubr.f32.mxu0 0.0
        %950 = vmatmul.mubr.f32.gmra.mrb[0].mxu0 %v727
        %v951 = vpop.f32.mrb[0].mxu0
        %v952 = vadd.f32 0.0, %v951
        %v953 = vpop.f32.mrb[0].mxu0
        %954 = vmatprep.mubr.f32.mxu0 0.0
        %955 = vmatmul.mubr.f32.gmra.mrb[0].mxu0 %v730
        %v956 = vpop.f32.mrb[0].mxu0
        %v957 = vadd.f32 0.0, %v956
        %v958 = vpop.f32.mrb[0].mxu0
        %959 = vdwg.mxu0
        %v960 = vpack.c.bf16 %v807, %v802
        %v961 = vpack.c.bf16 %v817, %v812
        %v962 = vpack.c.bf16 %v827, %v822
        %v963 = vpack.c.bf16 %v837, %v832
        %v964 = vpack.c.bf16 %v847, %v842
        %v965 = vpack.c.bf16 %v857, %v852
        %v966 = vpack.c.bf16 %v867, %v862
        %v967 = vpack.c.bf16 %v877, %v872
        %v968 = vpack.c.bf16 %v887, %v882
        %v969 = vpack.c.bf16 %v897, %v892
        %v970 = vpack.c.bf16 %v907, %v902
        %v971 = vpack.c.bf16 %v917, %v912
        %v972 = vpack.c.bf16 %v927, %v922
        %v973 = vpack.c.bf16 %v937, %v932
        %v974 = vpack.c.bf16 %v947, %v942
        %v975 = vpack.c.bf16 %v957, %v952
        %v976 = vpack.c.bf16 %v514, %v508
        %v977 = vpack.c.bf16 %v516, %v510
        %v978 = vpack.c.bf16 %v526, %v520
        %v979 = vpack.c.bf16 %v528, %v522
        %vm980 = vcmask 261120
        %v982 = vsel %vm980, %v960, 0
        %v985 = vsel %vm980, %v961, 0
        %v988 = vsel %vm980, %v962, 0
        %v991 = vsel %vm980, %v963, 0
        %v994 = vsel %vm980, %v964, 0
        %v997 = vsel %vm980, %v965, 0
        %v1000 = vsel %vm980, %v966, 0
        %v1003 = vsel %vm980, %v967, 0
        %v1006 = vsel %vm980, %v968, 0
        %v1009 = vsel %vm980, %v969, 0
        %v1012 = vsel %vm980, %v970, 0
        %v1015 = vsel %vm980, %v971, 0
        %v1018 = vsel %vm980, %v972, 0
        %v1021 = vsel %vm980, %v973, 0
        %v1024 = vsel %vm980, %v974, 0
        %v1027 = vsel %vm980, %v975, 0
        %1029 = vmatprep.subr.bf16.mxu0 %v977
        %1030 = vmatpush1.bf16.msra.mxu0 %v976
        %1031 = vmatprep.subr.bf16.mxu0 %v979
        %1032 = vmatpush1.bf16.msra.mxu0 %v978
        %1033 = vmatprep.subr.bf16.mxu0 0
        %1034 = vmatpush1.bf16.msra.mxu0 0
        %1035 = vmatprep.subr.bf16.mxu0 0
        %1036 = vmatpush1.bf16.msra.mxu0 0
        %1037 = vmatprep.subr.bf16.mxu0 0
        %1038 = vmatpush1.bf16.msra.mxu0 0
        %1039 = vmatprep.subr.bf16.mxu0 0
        %1040 = vmatpush1.bf16.msra.mxu0 0
        %1041 = vmatprep.subr.bf16.mxu0 0
        %1042 = vmatpush1.bf16.msra.mxu0 0
        %1043 = vmatprep.subr.bf16.mxu0 0
        %1044 = vmatpush1.bf16.msra.mxu0 0
        %1045 = vmatprep.subr.bf16.mxu0 0
        %1046 = vmatpush1.bf16.msra.mxu0 0
        %1047 = vmatprep.subr.bf16.mxu0 0
        %1048 = vmatpush1.bf16.msra.mxu0 0
        %1049 = vmatprep.subr.bf16.mxu0 0
        %1050 = vmatpush1.bf16.msra.mxu0 0
        %1051 = vmatprep.subr.bf16.mxu0 0
        %1052 = vmatpush1.bf16.msra.mxu0 0
        %1053 = vmatprep.subr.bf16.mxu0 0
        %1054 = vmatpush1.bf16.msra.mxu0 0
        %1055 = vmatprep.subr.bf16.mxu0 0
        %1056 = vmatpush1.bf16.msra.mxu0 0
        %1057 = vmatprep.subr.bf16.mxu0 0
        %1058 = vmatpush1.bf16.msra.mxu0 0
        %1059 = vmatprep.subr.bf16.mxu0 0
        %1060 = vmatpush1.bf16.msra.mxu0 0
        %1061 = vmatprep.mubr.bf16.mxu0 0
        %1062 = vmatmul.mubr.bf16.gmra.mrb[0].mxu0 %v982
        %v1063 = vpop.f32.mrb[0].mxu0
        %v1064 = vadd.f32 0.0, %v1063
        %v1065 = vpop.f32.mrb[0].mxu0
        %v1066 = vadd.f32 0.0, %v1065
        %v1067 = vpop.f32.mrb[0].mxu0
        %v1068 = vadd.f32 0.0, %v1067
        %v1069 = vpop.f32.mrb[0].mxu0
        %v1070 = vadd.f32 0.0, %v1069
        %1071 = vmatprep.mubr.bf16.mxu0 0
        %1072 = vmatmul.mubr.bf16.gmra.mrb[0].mxu0 %v985
        %v1073 = vpop.f32.mrb[0].mxu0
        %v1074 = vadd.f32 0.0, %v1073
        %v1075 = vpop.f32.mrb[0].mxu0
        %v1076 = vadd.f32 0.0, %v1075
        %v1077 = vpop.f32.mrb[0].mxu0
        %v1078 = vadd.f32 0.0, %v1077
        %v1079 = vpop.f32.mrb[0].mxu0
        %v1080 = vadd.f32 0.0, %v1079
        %1081 = vmatprep.mubr.bf16.mxu0 0
        %1082 = vmatmul.mubr.bf16.gmra.mrb[0].mxu0 %v988
        %v1083 = vpop.f32.mrb[0].mxu0
        %v1084 = vadd.f32 0.0, %v1083
        %v1085 = vpop.f32.mrb[0].mxu0
        %v1086 = vadd.f32 0.0, %v1085
        %v1087 = vpop.f32.mrb[0].mxu0
        %v1088 = vadd.f32 0.0, %v1087
        %v1089 = vpop.f32.mrb[0].mxu0
        %v1090 = vadd.f32 0.0, %v1089
        %1091 = vmatprep.mubr.bf16.mxu0 0
        %1092 = vmatmul.mubr.bf16.gmra.mrb[0].mxu0 %v991
        %v1093 = vpop.f32.mrb[0].mxu0
        %v1094 = vadd.f32 0.0, %v1093
        %v1095 = vpop.f32.mrb[0].mxu0
        %v1096 = vadd.f32 0.0, %v1095
        %v1097 = vpop.f32.mrb[0].mxu0
        %v1098 = vadd.f32 0.0, %v1097
        %v1099 = vpop.f32.mrb[0].mxu0
        %v1100 = vadd.f32 0.0, %v1099
        %1101 = vmatprep.mubr.bf16.mxu0 0
        %1102 = vmatmul.mubr.bf16.gmra.mrb[0].mxu0 %v994
        %v1103 = vpop.f32.mrb[0].mxu0
        %v1104 = vadd.f32 0.0, %v1103
        %v1105 = vpop.f32.mrb[0].mxu0
        %v1106 = vadd.f32 0.0, %v1105
        %v1107 = vpop.f32.mrb[0].mxu0
        %v1108 = vadd.f32 0.0, %v1107
        %v1109 = vpop.f32.mrb[0].mxu0
        %v1110 = vadd.f32 0.0, %v1109
        %1111 = vmatprep.mubr.bf16.mxu0 0
        %1112 = vmatmul.mubr.bf16.gmra.mrb[0].mxu0 %v997
        %v1113 = vpop.f32.mrb[0].mxu0
        %v1114 = vadd.f32 0.0, %v1113
        %v1115 = vpop.f32.mrb[0].mxu0
        %v1116 = vadd.f32 0.0, %v1115
        %v1117 = vpop.f32.mrb[0].mxu0
        %v1118 = vadd.f32 0.0, %v1117
        %v1119 = vpop.f32.mrb[0].mxu0
        %v1120 = vadd.f32 0.0, %v1119
        %1121 = vmatprep.mubr.bf16.mxu0 0
        %1122 = vmatmul.mubr.bf16.gmra.mrb[0].mxu0 %v1000
        %v1123 = vpop.f32.mrb[0].mxu0
        %v1124 = vadd.f32 0.0, %v1123
        %v1125 = vpop.f32.mrb[0].mxu0
        %v1126 = vadd.f32 0.0, %v1125
        %v1127 = vpop.f32.mrb[0].mxu0
        %v1128 = vadd.f32 0.0, %v1127
        %v1129 = vpop.f32.mrb[0].mxu0
        %v1130 = vadd.f32 0.0, %v1129
        %1131 = vmatprep.mubr.bf16.mxu0 0
        %1132 = vmatmul.mubr.bf16.gmra.mrb[0].mxu0 %v1003
        %v1133 = vpop.f32.mrb[0].mxu0
        %v1134 = vadd.f32 0.0, %v1133
        %v1135 = vpop.f32.mrb[0].mxu0
        %v1136 = vadd.f32 0.0, %v1135
        %v1137 = vpop.f32.mrb[0].mxu0
        %v1138 = vadd.f32 0.0, %v1137
        %v1139 = vpop.f32.mrb[0].mxu0
        %v1140 = vadd.f32 0.0, %v1139
        %1141 = vmatprep.mubr.bf16.mxu0 0
        %1142 = vmatmul.mubr.bf16.gmra.mrb[0].mxu0 %v1006
        %v1143 = vpop.f32.mrb[0].mxu0
        %v1144 = vadd.f32 0.0, %v1143
        %v1145 = vpop.f32.mrb[0].mxu0
        %v1146 = vadd.f32 0.0, %v1145
        %v1147 = vpop.f32.mrb[0].mxu0
        %v1148 = vadd.f32 0.0, %v1147
        %v1149 = vpop.f32.mrb[0].mxu0
        %v1150 = vadd.f32 0.0, %v1149
        %1151 = vmatprep.mubr.bf16.mxu0 0
        %1152 = vmatmul.mubr.bf16.gmra.mrb[0].mxu0 %v1009
        %v1153 = vpop.f32.mrb[0].mxu0
        %v1154 = vadd.f32 0.0, %v1153
        %v1155 = vpop.f32.mrb[0].mxu0
        %v1156 = vadd.f32 0.0, %v1155
        %v1157 = vpop.f32.mrb[0].mxu0
        %v1158 = vadd.f32 0.0, %v1157
        %v1159 = vpop.f32.mrb[0].mxu0
        %v1160 = vadd.f32 0.0, %v1159
        %1161 = vmatprep.mubr.bf16.mxu0 0
        %1162 = vmatmul.mubr.bf16.gmra.mrb[0].mxu0 %v1012
        %v1163 = vpop.f32.mrb[0].mxu0
        %v1164 = vadd.f32 0.0, %v1163
        %v1165 = vpop.f32.mrb[0].mxu0
        %v1166 = vadd.f32 0.0, %v1165
        %v1167 = vpop.f32.mrb[0].mxu0
        %v1168 = vadd.f32 0.0, %v1167
        %v1169 = vpop.f32.mrb[0].mxu0
        %v1170 = vadd.f32 0.0, %v1169
        %1171 = vmatprep.mubr.bf16.mxu0 0
        %1172 = vmatmul.mubr.bf16.gmra.mrb[0].mxu0 %v1015
        %v1173 = vpop.f32.mrb[0].mxu0
        %v1174 = vadd.f32 0.0, %v1173
        %v1175 = vpop.f32.mrb[0].mxu0
        %v1176 = vadd.f32 0.0, %v1175
        %v1177 = vpop.f32.mrb[0].mxu0
        %v1178 = vadd.f32 0.0, %v1177
        %v1179 = vpop.f32.mrb[0].mxu0
        %v1180 = vadd.f32 0.0, %v1179
        %1181 = vmatprep.mubr.bf16.mxu0 0
        %1182 = vmatmul.mubr.bf16.gmra.mrb[0].mxu0 %v1018
        %v1183 = vpop.f32.mrb[0].mxu0
        %v1184 = vadd.f32 0.0, %v1183
        %v1185 = vpop.f32.mrb[0].mxu0
        %v1186 = vadd.f32 0.0, %v1185
        %v1187 = vpop.f32.mrb[0].mxu0
        %v1188 = vadd.f32 0.0, %v1187
        %v1189 = vpop.f32.mrb[0].mxu0
        %v1190 = vadd.f32 0.0, %v1189
        %1191 = vmatprep.mubr.bf16.mxu0 0
        %1192 = vmatmul.mubr.bf16.gmra.mrb[0].mxu0 %v1021
        %v1193 = vpop.f32.mrb[0].mxu0
        %v1194 = vadd.f32 0.0, %v1193
        %v1195 = vpop.f32.mrb[0].mxu0
        %v1196 = vadd.f32 0.0, %v1195
        %v1197 = vpop.f32.mrb[0].mxu0
        %v1198 = vadd.f32 0.0, %v1197
        %v1199 = vpop.f32.mrb[0].mxu0
        %v1200 = vadd.f32 0.0, %v1199
        %1201 = vmatprep.mubr.bf16.mxu0 0
        %1202 = vmatmul.mubr.bf16.gmra.mrb[0].mxu0 %v1024
        %v1203 = vpop.f32.mrb[0].mxu0
        %v1204 = vadd.f32 0.0, %v1203
        %v1205 = vpop.f32.mrb[0].mxu0
        %v1206 = vadd.f32 0.0, %v1205
        %v1207 = vpop.f32.mrb[0].mxu0
        %v1208 = vadd.f32 0.0, %v1207
        %v1209 = vpop.f32.mrb[0].mxu0
        %v1210 = vadd.f32 0.0, %v1209
        %1211 = vmatprep.mubr.bf16.mxu0 0
        %1212 = vmatmul.mubr.bf16.gmra.mrb[0].mxu0 %v1027
        %v1213 = vpop.f32.mrb[0].mxu0
        %v1214 = vadd.f32 0.0, %v1213
        %v1215 = vpop.f32.mrb[0].mxu0
        %v1216 = vadd.f32 0.0, %v1215
        %v1217 = vpop.f32.mrb[0].mxu0
        %v1218 = vadd.f32 0.0, %v1217
        %v1219 = vpop.f32.mrb[0].mxu0
        %v1220 = vadd.f32 0.0, %v1219
        %1221 = vdwg.mxu0
        %v1222 = vmax.f32 %v1064, %v1074
        %v1223 = vmax.f32 %v1068, %v1078
        %v1224 = vmax.f32 %v1222, %v1084
        %v1225 = vmax.f32 %v1223, %v1088
        %v1226 = vmax.f32 %v1224, %v1094
        %v1227 = vmax.f32 %v1225, %v1098
        %v1228 = vmax.f32 %v1226, %v1104
        %v1229 = vmax.f32 %v1227, %v1108
        %v1230 = vmax.f32 %v1228, %v1114
        %v1231 = vmax.f32 %v1229, %v1118
        %v1232 = vmax.f32 %v1230, %v1124
        %v1233 = vmax.f32 %v1231, %v1128
        %v1234 = vmax.f32 %v1232, %v1134
        %v1235 = vmax.f32 %v1233, %v1138
        %v1236 = vmax.f32 %v1234, %v1144
        %v1237 = vmax.f32 %v1235, %v1148
        %v1238 = vmax.f32 %v1236, %v1154
        %v1239 = vmax.f32 %v1237, %v1158
        %v1240 = vmax.f32 %v1238, %v1164
        %v1241 = vmax.f32 %v1239, %v1168
        %v1242 = vmax.f32 %v1240, %v1174
        %v1243 = vmax.f32 %v1241, %v1178
        %v1244 = vmax.f32 %v1242, %v1184
        %v1245 = vmax.f32 %v1243, %v1188
        %v1246 = vmax.f32 %v1244, %v1194
        %v1247 = vmax.f32 %v1245, %v1198
        %v1248 = vmax.f32 %v1246, %v1204
        %v1249 = vmax.f32 %v1247, %v1208
        %v1250 = vmax.f32 %v1248, %v1214
        %v1251 = vmax.f32 %v1249, %v1218
        %v1252 = vmax.f32 %v1250, %v1251
        %v1253 = vrot.slane %v1252, 4
        %v1254 = vmax.f32 %v1252, %v1253
        %v1255 = vrot.slane %v1254, 2
        %v1256 = vmax.f32 %v1254, %v1255
        %v1257 = vrot.slane %v1256, 1
        %v1258 = vmax.f32 %v1256, %v1257
        %v1259 = vmax.f32 %v1066, %v1076
        %v1260 = vmax.f32 %v1070, %v1080
        %v1261 = vmax.f32 %v1259, %v1086
        %v1262 = vmax.f32 %v1260, %v1090
        %v1263 = vmax.f32 %v1261, %v1096
        %v1264 = vmax.f32 %v1262, %v1100
        %v1265 = vmax.f32 %v1263, %v1106
        %v1266 = vmax.f32 %v1264, %v1110
        %v1267 = vmax.f32 %v1265, %v1116
        %v1268 = vmax.f32 %v1266, %v1120
        %v1269 = vmax.f32 %v1267, %v1126
        %v1270 = vmax.f32 %v1268, %v1130
        %v1271 = vmax.f32 %v1269, %v1136
        %v1272 = vmax.f32 %v1270, %v1140
        %v1273 = vmax.f32 %v1271, %v1146
        %v1274 = vmax.f32 %v1272, %v1150
        %v1275 = vmax.f32 %v1273, %v1156
        %v1276 = vmax.f32 %v1274, %v1160
        %v1277 = vmax.f32 %v1275, %v1166
        %v1278 = vmax.f32 %v1276, %v1170
        %v1279 = vmax.f32 %v1277, %v1176
        %v1280 = vmax.f32 %v1278, %v1180
        %v1281 = vmax.f32 %v1279, %v1186
        %v1282 = vmax.f32 %v1280, %v1190
        %v1283 = vmax.f32 %v1281, %v1196
        %v1284 = vmax.f32 %v1282, %v1200
        %v1285 = vmax.f32 %v1283, %v1206
        %v1286 = vmax.f32 %v1284, %v1210
        %v1287 = vmax.f32 %v1285, %v1216
        %v1288 = vmax.f32 %v1286, %v1220
        %v1289 = vmax.f32 %v1287, %v1288
        %v1290 = vrot.slane %v1289, 4
        %v1291 = vmax.f32 %v1289, %v1290
        %v1292 = vrot.slane %v1291, 2
        %v1293 = vmax.f32 %v1291, %v1292
        %v1294 = vrot.slane %v1293, 1
        %v1295 = vmax.f32 %v1293, %v1294
        %v1296 = vsub.f32 %v1064, %v1258
        %v1297 = vsub.f32 %v1066, %v1295
        %v1298 = vsub.f32 %v1068, %v1258
        %v1299 = vsub.f32 %v1070, %v1295
        %v1300 = vsub.f32 %v1074, %v1258
        %v1301 = vsub.f32 %v1076, %v1295
        %v1302 = vsub.f32 %v1078, %v1258
        %v1303 = vsub.f32 %v1080, %v1295
        %v1304 = vsub.f32 %v1084, %v1258
        %v1305 = vsub.f32 %v1086, %v1295
        %v1306 = vsub.f32 %v1088, %v1258
        %v1307 = vsub.f32 %v1090, %v1295
        %v1308 = vsub.f32 %v1094, %v1258
        %v1309 = vsub.f32 %v1096, %v1295
        %v1310 = vsub.f32 %v1098, %v1258
        %v1311 = vsub.f32 %v1100, %v1295
        %v1312 = vsub.f32 %v1104, %v1258
        %v1313 = vsub.f32 %v1106, %v1295
        %v1314 = vsub.f32 %v1108, %v1258
        %v1315 = vsub.f32 %v1110, %v1295
        %v1316 = vsub.f32 %v1114, %v1258
        %v1317 = vsub.f32 %v1116, %v1295
        %v1318 = vsub.f32 %v1118, %v1258
        %v1319 = vsub.f32 %v1120, %v1295
        %v1320 = vsub.f32 %v1124, %v1258
        %v1321 = vsub.f32 %v1126, %v1295
        %v1322 = vsub.f32 %v1128, %v1258
        %v1323 = vsub.f32 %v1130, %v1295
        %v1324 = vsub.f32 %v1134, %v1258
        %v1325 = vsub.f32 %v1136, %v1295
        %v1326 = vsub.f32 %v1138, %v1258
        %v1327 = vsub.f32 %v1140, %v1295
        %v1328 = vsub.f32 %v1144, %v1258
        %v1329 = vsub.f32 %v1146, %v1295
        %v1330 = vsub.f32 %v1148, %v1258
        %v1331 = vsub.f32 %v1150, %v1295
        %v1332 = vsub.f32 %v1154, %v1258
        %v1333 = vsub.f32 %v1156, %v1295
        %v1334 = vsub.f32 %v1158, %v1258
        %v1335 = vsub.f32 %v1160, %v1295
        %v1336 = vsub.f32 %v1164, %v1258
        %v1337 = vsub.f32 %v1166, %v1295
        %v1338 = vsub.f32 %v1168, %v1258
        %v1339 = vsub.f32 %v1170, %v1295
        %v1340 = vsub.f32 %v1174, %v1258
        %v1341 = vsub.f32 %v1176, %v1295
        %v1342 = vsub.f32 %v1178, %v1258
        %v1343 = vsub.f32 %v1180, %v1295
        %v1344 = vsub.f32 %v1184, %v1258
        %v1345 = vsub.f32 %v1186, %v1295
        %v1346 = vsub.f32 %v1188, %v1258
        %v1347 = vsub.f32 %v1190, %v1295
        %v1348 = vsub.f32 %v1194, %v1258
        %v1349 = vsub.f32 %v1196, %v1295
        %v1350 = vsub.f32 %v1198, %v1258
        %v1351 = vsub.f32 %v1200, %v1295
        %v1352 = vsub.f32 %v1204, %v1258
        %v1353 = vsub.f32 %v1206, %v1295
        %v1354 = vsub.f32 %v1208, %v1258
        %v1355 = vsub.f32 %v1210, %v1295
        %v1356 = vsub.f32 %v1214, %v1258
        %v1357 = vsub.f32 %v1216, %v1295
        %v1358 = vsub.f32 %v1218, %v1258
        %v1359 = vsub.f32 %v1220, %v1295
        %v1360 = vmul.f32 %v1296, 1.442695
        %v1361 = vpow.pop %v1360
        %v1362 = vmul.f32 %v1297, 1.442695
        %v1363 = vpow.pop %v1362
        %v1364 = vmul.f32 %v1298, 1.442695
        %v1365 = vpow.pop %v1364
        %v1366 = vmul.f32 %v1299, 1.442695
        %v1367 = vpow.pop %v1366
        %v1368 = vmul.f32 %v1300, 1.442695
        %v1369 = vpow.pop %v1368
        %v1370 = vmul.f32 %v1301, 1.442695
        %v1371 = vpow.pop %v1370
        %v1372 = vmul.f32 %v1302, 1.442695
        %v1373 = vpow.pop %v1372
        %v1374 = vmul.f32 %v1303, 1.442695
        %v1375 = vpow.pop %v1374
        %v1376 = vmul.f32 %v1304, 1.442695
        %v1377 = vpow.pop %v1376
        %v1378 = vmul.f32 %v1305, 1.442695
        %v1379 = vpow.pop %v1378
        %v1380 = vmul.f32 %v1306, 1.442695
        %v1381 = vpow.pop %v1380
        %v1382 = vmul.f32 %v1307, 1.442695
        %v1383 = vpow.pop %v1382
        %v1384 = vmul.f32 %v1308, 1.442695
        %v1385 = vpow.pop %v1384
        %v1386 = vmul.f32 %v1309, 1.442695
        %v1387 = vpow.pop %v1386
        %v1388 = vmul.f32 %v1310, 1.442695
        %v1389 = vpow.pop %v1388
        %v1390 = vmul.f32 %v1311, 1.442695
        %v1391 = vpow.pop %v1390
        %v1392 = vmul.f32 %v1312, 1.442695
        %v1393 = vpow.pop %v1392
        %v1394 = vmul.f32 %v1313, 1.442695
        %v1395 = vpow.pop %v1394
        %v1396 = vmul.f32 %v1314, 1.442695
        %v1397 = vpow.pop %v1396
        %v1398 = vmul.f32 %v1315, 1.442695
        %v1399 = vpow.pop %v1398
        %v1400 = vmul.f32 %v1316, 1.442695
        %v1401 = vpow.pop %v1400
        %v1402 = vmul.f32 %v1317, 1.442695
        %v1403 = vpow.pop %v1402
        %v1404 = vmul.f32 %v1318, 1.442695
        %v1405 = vpow.pop %v1404
        %v1406 = vmul.f32 %v1319, 1.442695
        %v1407 = vpow.pop %v1406
        %v1408 = vmul.f32 %v1320, 1.442695
        %v1409 = vpow.pop %v1408
        %v1410 = vmul.f32 %v1321, 1.442695
        %v1411 = vpow.pop %v1410
        %v1412 = vmul.f32 %v1322, 1.442695
        %v1413 = vpow.pop %v1412
        %v1414 = vmul.f32 %v1323, 1.442695
        %v1415 = vpow.pop %v1414
        %v1416 = vmul.f32 %v1324, 1.442695
        %v1417 = vpow.pop %v1416
        %v1418 = vmul.f32 %v1325, 1.442695
        %v1419 = vpow.pop %v1418
        %v1420 = vmul.f32 %v1326, 1.442695
        %v1421 = vpow.pop %v1420
        %v1422 = vmul.f32 %v1327, 1.442695
        %v1423 = vpow.pop %v1422
        %v1424 = vmul.f32 %v1328, 1.442695
        %v1425 = vpow.pop %v1424
        %v1426 = vmul.f32 %v1329, 1.442695
        %v1427 = vpow.pop %v1426
        %v1428 = vmul.f32 %v1330, 1.442695
        %v1429 = vpow.pop %v1428
        %v1430 = vmul.f32 %v1331, 1.442695
        %v1431 = vpow.pop %v1430
        %v1432 = vmul.f32 %v1332, 1.442695
        %v1433 = vpow.pop %v1432
        %v1434 = vmul.f32 %v1333, 1.442695
        %v1435 = vpow.pop %v1434
        %v1436 = vmul.f32 %v1334, 1.442695
        %v1437 = vpow.pop %v1436
        %v1438 = vmul.f32 %v1335, 1.442695
        %v1439 = vpow.pop %v1438
        %v1440 = vmul.f32 %v1336, 1.442695
        %v1441 = vpow.pop %v1440
        %v1442 = vmul.f32 %v1337, 1.442695
        %v1443 = vpow.pop %v1442
        %v1444 = vmul.f32 %v1338, 1.442695
        %v1445 = vpow.pop %v1444
        %v1446 = vmul.f32 %v1339, 1.442695
        %v1447 = vpow.pop %v1446
        %v1448 = vmul.f32 %v1340, 1.442695
        %v1449 = vpow.pop %v1448
        %v1450 = vmul.f32 %v1341, 1.442695
        %v1451 = vpow.pop %v1450
        %v1452 = vmul.f32 %v1342, 1.442695
        %v1453 = vpow.pop %v1452
        %v1454 = vmul.f32 %v1343, 1.442695
        %v1455 = vpow.pop %v1454
        %v1456 = vmul.f32 %v1344, 1.442695
        %v1457 = vpow.pop %v1456
        %v1458 = vmul.f32 %v1345, 1.442695
        %v1459 = vpow.pop %v1458
        %v1460 = vmul.f32 %v1346, 1.442695
        %v1461 = vpow.pop %v1460
        %v1462 = vmul.f32 %v1347, 1.442695
        %v1463 = vpow.pop %v1462
        %v1464 = vmul.f32 %v1348, 1.442695
        %v1465 = vpow.pop %v1464
        %v1466 = vmul.f32 %v1349, 1.442695
        %v1467 = vpow.pop %v1466
        %v1468 = vmul.f32 %v1350, 1.442695
        %v1469 = vpow.pop %v1468
        %v1470 = vmul.f32 %v1351, 1.442695
        %v1471 = vpow.pop %v1470
        %v1472 = vmul.f32 %v1352, 1.442695
        %v1473 = vpow.pop %v1472
        %v1474 = vmul.f32 %v1353, 1.442695
        %v1475 = vpow.pop %v1474
        %v1476 = vmul.f32 %v1354, 1.442695
        %v1477 = vpow.pop %v1476
        %v1478 = vmul.f32 %v1355, 1.442695
        %v1479 = vpow.pop %v1478
        %v1480 = vmul.f32 %v1356, 1.442695
        %v1481 = vpow.pop %v1480
        %v1482 = vmul.f32 %v1357, 1.442695
        %v1483 = vpow.pop %v1482
        %v1484 = vmul.f32 %v1358, 1.442695
        %v1485 = vpow.pop %v1484
        %v1486 = vmul.f32 %v1359, 1.442695
        %v1487 = vpow.pop %v1486
        %v1488 = vadd.f32 %v1361, %v1365
        %v1489 = vadd.f32 %v1488, %v1369
        %v1490 = vadd.f32 %v1489, %v1373
        %v1491 = vadd.f32 %v1490, %v1377
        %v1492 = vadd.f32 %v1491, %v1381
        %v1493 = vadd.f32 %v1492, %v1385
        %v1494 = vadd.f32 %v1493, %v1389
        %v1495 = vadd.f32 %v1494, %v1393
        %v1496 = vadd.f32 %v1495, %v1397
        %v1497 = vadd.f32 %v1496, %v1401
        %v1498 = vadd.f32 %v1497, %v1405
        %v1499 = vadd.f32 %v1498, %v1409
        %v1500 = vadd.f32 %v1499, %v1413
        %v1501 = vadd.f32 %v1500, %v1417
        %v1502 = vadd.f32 %v1501, %v1421
        %v1503 = vadd.f32 %v1502, %v1425
        %v1504 = vadd.f32 %v1503, %v1429
        %v1505 = vadd.f32 %v1504, %v1433
        %v1506 = vadd.f32 %v1505, %v1437
        %v1507 = vadd.f32 %v1506, %v1441
        %v1508 = vadd.f32 %v1507, %v1445
        %v1509 = vadd.f32 %v1508, %v1449
        %v1510 = vadd.f32 %v1509, %v1453
        %v1511 = vadd.f32 %v1510, %v1457
        %v1512 = vadd.f32 %v1511, %v1461
        %v1513 = vadd.f32 %v1512, %v1465
        %v1514 = vadd.f32 %v1513, %v1469
        %v1515 = vadd.f32 %v1514, %v1473
        %v1516 = vadd.f32 %v1515, %v1477
        %v1517 = vadd.f32 %v1516, %v1481
        %v1518 = vadd.f32 %v1517, %v1485
        %v1519 = vrot.slane %v1518, 4
        %v1520 = vadd.f32 %v1518, %v1519
        %v1521 = vrot.slane %v1520, 2
        %v1522 = vadd.f32 %v1520, %v1521
        %v1523 = vrot.slane %v1522, 1
        %v1524 = vadd.f32 %v1522, %v1523
        %v1525 = vadd.f32 %v1363, %v1367
        %v1526 = vadd.f32 %v1525, %v1371
        %v1527 = vadd.f32 %v1526, %v1375
        %v1528 = vadd.f32 %v1527, %v1379
        %v1529 = vadd.f32 %v1528, %v1383
        %v1530 = vadd.f32 %v1529, %v1387
        %v1531 = vadd.f32 %v1530, %v1391
        %v1532 = vadd.f32 %v1531, %v1395
        %v1533 = vadd.f32 %v1532, %v1399
        %v1534 = vadd.f32 %v1533, %v1403
        %v1535 = vadd.f32 %v1534, %v1407
        %v1536 = vadd.f32 %v1535, %v1411
        %v1537 = vadd.f32 %v1536, %v1415
        %v1538 = vadd.f32 %v1537, %v1419
        %v1539 = vadd.f32 %v1538, %v1423
        %v1540 = vadd.f32 %v1539, %v1427
        %v1541 = vadd.f32 %v1540, %v1431
        %v1542 = vadd.f32 %v1541, %v1435
        %v1543 = vadd.f32 %v1542, %v1439
        %v1544 = vadd.f32 %v1543, %v1443
        %v1545 = vadd.f32 %v1544, %v1447
        %v1546 = vadd.f32 %v1545, %v1451
        %v1547 = vadd.f32 %v1546, %v1455
        %v1548 = vadd.f32 %v1547, %v1459
        %v1549 = vadd.f32 %v1548, %v1463
        %v1550 = vadd.f32 %v1549, %v1467
        %v1551 = vadd.f32 %v1550, %v1471
        %v1552 = vadd.f32 %v1551, %v1475
        %v1553 = vadd.f32 %v1552, %v1479
        %v1554 = vadd.f32 %v1553, %v1483
        %v1555 = vadd.f32 %v1554, %v1487
        %v1556 = vrot.slane %v1555, 4
        %v1557 = vadd.f32 %v1555, %v1556
        %v1558 = vrot.slane %v1557, 2
        %v1559 = vadd.f32 %v1557, %v1558
        %v1560 = vrot.slane %v1559, 1
        %v1561 = vadd.f32 %v1559, %v1560
        %v1562 = vpack.c.bf16 %v619, %v613
        %v1563 = vpack.c.bf16 %v621, %v615
        %v1564 = vpack.c.bf16 %v631, %v625
        %v1565 = vpack.c.bf16 %v633, %v627
        %v1566 = vpack.c.bf16 %v1365, %v1361
        %v1567 = vpack.c.bf16 %v1367, %v1363
        %v1568 = vpack.c.bf16 %v1373, %v1369
        %v1569 = vpack.c.bf16 %v1375, %v1371
        %v1570 = vpack.c.bf16 %v1381, %v1377
        %v1571 = vpack.c.bf16 %v1383, %v1379
        %v1572 = vpack.c.bf16 %v1389, %v1385
        %v1573 = vpack.c.bf16 %v1391, %v1387
        %v1574 = vpack.c.bf16 %v1397, %v1393
        %v1575 = vpack.c.bf16 %v1399, %v1395
        %v1576 = vpack.c.bf16 %v1405, %v1401
        %v1577 = vpack.c.bf16 %v1407, %v1403
        %v1578 = vpack.c.bf16 %v1413, %v1409
        %v1579 = vpack.c.bf16 %v1415, %v1411
        %v1580 = vpack.c.bf16 %v1421, %v1417
        %v1581 = vpack.c.bf16 %v1423, %v1419
        %v1582 = vpack.c.bf16 %v1429, %v1425
        %v1583 = vpack.c.bf16 %v1431, %v1427
        %v1584 = vpack.c.bf16 %v1437, %v1433
        %v1585 = vpack.c.bf16 %v1439, %v1435
        %v1586 = vpack.c.bf16 %v1445, %v1441
        %v1587 = vpack.c.bf16 %v1447, %v1443
        %v1588 = vpack.c.bf16 %v1453, %v1449
        %v1589 = vpack.c.bf16 %v1455, %v1451
        %v1590 = vpack.c.bf16 %v1461, %v1457
        %v1591 = vpack.c.bf16 %v1463, %v1459
        %v1592 = vpack.c.bf16 %v1469, %v1465
        %v1593 = vpack.c.bf16 %v1471, %v1467
        %v1594 = vpack.c.bf16 %v1477, %v1473
        %v1595 = vpack.c.bf16 %v1479, %v1475
        %v1596 = vpack.c.bf16 %v1485, %v1481
        %v1597 = vpack.c.bf16 %v1487, %v1483
        %1598 = vmatprep.subr.bf16.mxu0 %v1567
        %1599 = vmatpush1.bf16.msra.mxu0 %v1566
        %1600 = vmatprep.subr.bf16.mxu0 %v1569
        %1601 = vmatpush1.bf16.msra.mxu0 %v1568
        %1602 = vmatprep.subr.bf16.mxu0 %v1571
        %1603 = vmatpush1.bf16.msra.mxu0 %v1570
        %1604 = vmatprep.subr.bf16.mxu0 %v1573
        %1605 = vmatpush1.bf16.msra.mxu0 %v1572
        %1606 = vmatprep.subr.bf16.mxu0 %v1575
        %1607 = vmatpush1.bf16.msra.mxu0 %v1574
        %1608 = vmatprep.subr.bf16.mxu0 %v1577
        %1609 = vmatpush1.bf16.msra.mxu0 %v1576
        %1610 = vmatprep.subr.bf16.mxu0 %v1579
        %1611 = vmatpush1.bf16.msra.mxu0 %v1578
        %1612 = vmatprep.subr.bf16.mxu0 %v1581
        %1613 = vmatpush1.bf16.msra.mxu0 %v1580
        %1614 = vmatprep.subr.bf16.mxu0 %v1583
        %1615 = vmatpush1.bf16.msra.mxu0 %v1582
        %1616 = vmatprep.subr.bf16.mxu0 %v1585
        %1617 = vmatpush1.bf16.msra.mxu0 %v1584
        %1618 = vmatprep.subr.bf16.mxu0 %v1587
        %1619 = vmatpush1.bf16.msra.mxu0 %v1586
        %1620 = vmatprep.subr.bf16.mxu0 %v1589
        %1621 = vmatpush1.bf16.msra.mxu0 %v1588
        %1622 = vmatprep.subr.bf16.mxu0 %v1591
        %1623 = vmatpush1.bf16.msra.mxu0 %v1590
        %1624 = vmatprep.subr.bf16.mxu0 %v1593
        %1625 = vmatpush1.bf16.msra.mxu0 %v1592
        %1626 = vmatprep.subr.bf16.mxu0 %v1595
        %1627 = vmatpush1.bf16.msra.mxu0 %v1594
        %1628 = vmatprep.subr.bf16.mxu0 %v1597
        %1629 = vmatpush1.bf16.msra.mxu0 %v1596
        %1630 = vmatprep.mubr.bf16.mxu0 %v1563
        %1631 = vmatmul.mubr.bf16.gmra.mrb[0].mxu0 %v1562
        %v1632 = vpop.f32.mrb[0].mxu0
        %v1633 = vadd.f32 0.0, %v1632
        %v1634 = vpop.f32.mrb[0].mxu0
        %v1635 = vadd.f32 0.0, %v1634
        %v1636 = vpop.f32.mrb[0].mxu0
        %v1637 = vadd.f32 0.0, %v1636
        %v1638 = vpop.f32.mrb[0].mxu0
        %v1639 = vadd.f32 0.0, %v1638
        %1640 = vmatprep.mubr.bf16.mxu0 %v1565
        %1641 = vmatmul.mubr.bf16.gmra.mrb[0].mxu0 %v1564
        %v1642 = vpop.f32.mrb[0].mxu0
        %v1643 = vadd.f32 0.0, %v1642
        %v1644 = vpop.f32.mrb[0].mxu0
        %v1645 = vadd.f32 0.0, %v1644
        %v1646 = vpop.f32.mrb[0].mxu0
        %v1647 = vadd.f32 0.0, %v1646
        %v1648 = vpop.f32.mrb[0].mxu0
        %v1649 = vadd.f32 0.0, %v1648
        %1650 = vdwg.mxu0
        %v1651 = vrcp.pop %v1524
        %v1652 = vrcp.pop %v1561
        %v1653 = vmul.f32 %v1633, %v1651
        %v1654 = vmul.f32 %v1635, %v1652
        %v1655 = vmul.f32 %v1637, %v1651
        %v1656 = vmul.f32 %v1639, %v1652
        %v1657 = vmul.f32 %v1643, %v1651
        %v1658 = vmul.f32 %v1645, %v1652
        %v1659 = vmul.f32 %v1647, %v1651
        %v1660 = vmul.f32 %v1649, %v1652
        %v1661 = vld [vmem:[%s382] sm:$0xf]
        %v1663 = vsel %vm980, %v1661, 0
        %1665 = vmatprep.subr.mxu0 %v1654
        %1666 = vmatpush1.msra.mxu0 %v1653
        %1667 = vmatprep.subr.mxu0 %v1656
        %1668 = vmatpush1.msra.mxu0 %v1655
        %1669 = vmatprep.subr.mxu0 %v1658
        %1670 = vmatpush1.msra.mxu0 %v1657
        %1671 = vmatprep.subr.mxu0 %v1660
        %1672 = vmatpush1.msra.mxu0 %v1659
        %1673 = vmatprep.subr.mxu0 0.0
        %1674 = vmatpush1.msra.mxu0 0.0
        %1675 = vmatprep.subr.mxu0 0.0
        %1676 = vmatpush1.msra.mxu0 0.0
        %1677 = vmatprep.subr.mxu0 0.0
        %1678 = vmatpush1.msra.mxu0 0.0
        %1679 = vmatprep.subr.mxu0 0.0
        %1680 = vmatpush1.msra.mxu0 0.0
        %1681 = vmatprep.subr.mxu0 0.0
        %1682 = vmatpush1.msra.mxu0 0.0
        %1683 = vmatprep.subr.mxu0 0.0
        %1684 = vmatpush1.msra.mxu0 0.0
        %1685 = vmatprep.subr.mxu0 0.0
        %1686 = vmatpush1.msra.mxu0 0.0
        %1687 = vmatprep.subr.mxu0 0.0
        %1688 = vmatpush1.msra.mxu0 0.0
        %1689 = vmatprep.subr.mxu0 0.0
        %1690 = vmatpush1.msra.mxu0 0.0
        %1691 = vmatprep.subr.mxu0 0.0
        %1692 = vmatpush1.msra.mxu0 0.0
        %1693 = vmatprep.subr.mxu0 0.0
        %1694 = vmatpush1.msra.mxu0 0.0
        %1695 = vmatprep.subr.mxu0 0.0
        %1696 = vmatpush1.msra.mxu0 0.0
        %1697 = vmatprep.subr.mxu0 0.0
        %1698 = vmatpush1.msra.mxu0 0.0
        %1699 = vmatprep.subr.mxu0 0.0
        %1700 = vmatpush1.msra.mxu0 0.0
        %1701 = vmatprep.subr.mxu0 0.0
        %1702 = vmatpush1.msra.mxu0 0.0
        %1703 = vmatprep.subr.mxu0 0.0
        %1704 = vmatpush1.msra.mxu0 0.0
        %1705 = vmatprep.subr.mxu0 0.0
        %1706 = vmatpush1.msra.mxu0 0.0
        %1707 = vmatprep.subr.mxu0 0.0
        %1708 = vmatpush1.msra.mxu0 0.0
        %1709 = vmatprep.subr.mxu0 0.0
        %1710 = vmatpush1.msra.mxu0 0.0
        %1711 = vmatprep.subr.mxu0 0.0
        %1712 = vmatpush1.msra.mxu0 0.0
        %1713 = vmatprep.subr.mxu0 0.0
        %1714 = vmatpush1.msra.mxu0 0.0
        %1715 = vmatprep.subr.mxu0 0.0
        %1716 = vmatpush1.msra.mxu0 0.0
        %1717 = vmatprep.subr.mxu0 0.0
        %1718 = vmatpush1.msra.mxu0 0.0
        %1719 = vmatprep.subr.mxu0 0.0
        %1720 = vmatpush1.msra.mxu0 0.0
        %1721 = vmatprep.subr.mxu0 0.0
        %1722 = vmatpush1.msra.mxu0 0.0
        %1723 = vmatprep.subr.mxu0 0.0
        %1724 = vmatpush1.msra.mxu0 0.0
        %1725 = vmatprep.subr.mxu0 0.0
        %1726 = vmatpush1.msra.mxu0 0.0
        %1727 = vmatprep.subr.mxu0 0.0
        %1728 = vmatpush1.msra.mxu0 0.0
        %1729 = vmatprep.mubr.f32.mxu0 0.0
        %1730 = vmatmul.mubr.f32.gmra.mrb[0].mxu0 %v1663
        %v1731 = vpop.f32.mrb[0].mxu0
        %v1732 = vadd.f32 0.0, %v1731
        %v1733 = vpop.f32.mrb[0].mxu0
        %v1734 = vadd.f32 0.0, %v1733
        %1735 = vdwg.mxu0
        %p1736 = scmp.eq.s32.totalorder %s26, 0
        // Predicated region
        $region49: #{tpu_custom_call.1} parent=47 // pred_check
          %p1737 = pneg %p1736
        $region50: #{tpu_custom_call.1} parent=47 // pred_check_branch
          %1739 = sbr.rel (%p1737) target = $region52
        $region51: #{tpu_custom_call.1} parent=47 // pred_region
          %v1740 = vld [vmem:[%s6] sm:$0xf]
          %1742 = vset.pattern.permute.xlu0 0
          %1743 = vperm.xlu0 %1742, %v1740
          %v1744 = vpop.permute.xlu0 %1743
          %v1746 = vunpack.c.l.s4 839922192
          %v1747 = vunpack.c.0.s8 %v1746
          %v1748 = vlaneseq
          %v1749 = vshrl.u32 %v1748, 7
          %v1750 = vsub.s32 %v1747, %v1749
          %v1751 = vrot.slane %v1744, %v1750
          %1753 = vst [vmem:[%s354] sm:$0xff] %v1751
        $region52: #{tpu_custom_call.1} parent=47 // pred_fallthru
          _
        %v1754 = vld [vmem:[%s354] sm:$0xff]
        %v1757 = vcombine.low %v1732, %v1734
        %v1759 = vadd.f32 %v1754, %v1757
        %1760 = vst [vmem:[%s354] sm:$0xff] %v1759
        %s1761 = sand.u32 %s218, 1
        %s1762 = scalar_lea.sflag [#allocation3], %s1761
        %s1763 = sand.u32 %s218, 1
        %s1764 = smul.addr %s1763, 8
        %s1765 = scalar_lea.vmem [#allocation2], %s1764
        // Predicated region
        $region53: #{tpu_custom_call.1} parent=47 // pred_check
          %p1766 = pneg %p228
        $region54: #{tpu_custom_call.1} parent=47 // pred_check_branch
          %1768 = sbr.rel (%p1766) target = $region56
        $region55: #{tpu_custom_call.1} parent=47 // pred_region
          %s1770 = ssub.s32 128, 128
          %1771 = vsyncadd %s1762, %s1770
          %s1772 = smul.addr %s25, 2
          %s1773 = smul.addr %s1772, 64
          %s1774 = scalar_lea.hbm %s7, %s1773
          %s1776 = sshll.u32 %s1765, 4
          %s1777 = int_to_ptr.vmem [resolvable:$true] %s1776
          %1779 = dma.vmem_to_hbm [thread:$0]  %s1777, 128, %s1774, %s1762
        $region56: #{tpu_custom_call.1} parent=47 // pred_fallthru
          _
      $region48: #{tpu_custom_call.1} parent=5 // pred_fallthru
        _
      %p1780 = scmp.le.s32.totalorder 2, %s16
      // Predicated region
      $region57: #{tpu_custom_call.1} parent=5 // pred_check
        %p1781 = pneg %p1780
      $region58: #{tpu_custom_call.1} parent=5 // pred_check_branch
        %1783 = sbr.rel (%p1781) target = $region60
      $region59: #{tpu_custom_call.1} parent=5 // pred_region
        %s1784 = ssub.s32 %s16, 2
        // Predicated region
        $region61: #{tpu_custom_call.1} parent=59 // pred_check
          %p1785 = pneg %p234
        $region62: #{tpu_custom_call.1} parent=59 // pred_check_branch
          %1787 = sbr.rel (%p1785) target = $region64
        $region63: #{tpu_custom_call.1} parent=59 // pred_region
          %s1788 = sand.u32 %s219, 1
          %s1789 = scalar_lea.sflag [#allocation3], %s1788
          %s1790 = sand.u32 %s219, 1
          %s1791 = smul.addr %s1790, 8
          %s1792 = scalar_lea.vmem [#allocation2], %s1791
          %1793 = dma.done %s1789, 128
        $region64: #{tpu_custom_call.1} parent=59 // pred_fallthru
          _
      $region60: #{tpu_custom_call.1} parent=5 // pred_fallthru
        _
    $region6: #{tpu_custom_call.1} parent=1 // loop_footer
      %s20 = sadd.s32 1, %s16
    $region7: #{tpu_custom_call.1} parent=1 // loop_footer_branch
      %15 = sbr.rel target = $region3
    $region8: #{tpu_custom_call.1} parent=1 // loop_exit
      _
    %1794 = vsyncpa [#allocation3], 1
    %s1795 = scalar_lea.sflag [#allocation3], 1
    %1796 = vsyncpa %s1795, 1

</llo_original>
